<compile_context>
chip_gen: v7x
topology: tpu7x:2x2x1
jax: 0.10.0
libtpu: 0.0.40
codegen_flags: <defaults>
</compile_context>

<pallas_src>
import functools
import math

import jax
import jax.numpy as jnp
from jax import lax
from jax.experimental import pallas as pl
from jax.experimental.pallas import tpu as pltpu


def _round_up(x, m):
    return (x + m - 1) // m * m


def _vmem_capacity_bytes():
    try:
        return int(pltpu.get_tpu_info().vmem_capacity_bytes)
    except Exception:
        return 64 * 1024 * 1024  # conservative default (v7x per-TC)


# --------------------------------------------------------------------------
# Monolithic kernel: whole (S, S) score tile per batch block (small / medium S).
# --------------------------------------------------------------------------
def _attention_ln_kernel(x_ref, wqkv_ref, gamma_ref, beta_ref, o_ref, *, eps, d_real):
    Bblk, S, Dp = x_ref.shape
    M = Bblk * S

    # bf16 activations feed the MXU; accumulation stays f32.
    xm = x_ref[...].reshape(M, Dp).astype(jnp.bfloat16)

    # Fused Q|K|V projection (1/sqrt(D) already folded into the Wq slice).
    qkv = jnp.dot(xm, wqkv_ref[...], preferred_element_type=jnp.float32)  # (M, 3Dp)
    qkv = qkv.reshape(Bblk, S, 3 * Dp)
    q = qkv[:, :, 0 * Dp:1 * Dp].astype(jnp.bfloat16)
    k = qkv[:, :, 1 * Dp:2 * Dp].astype(jnp.bfloat16)
    v = qkv[:, :, 2 * Dp:3 * Dp].astype(jnp.bfloat16)

    # Scores: contract the feature axis directly (no explicit k transpose).
    s = lax.dot_general(q, k, (((2,), (2,)), ((0,), (0,))),
                        preferred_element_type=jnp.float32)               # (Bblk,S,S)

    # Numerically stable softmax; normalization deferred past the PV matmul.
    m = jnp.max(s, axis=-1, keepdims=True)
    e = jnp.exp(s - m)
    denom = jnp.sum(e, axis=-1, keepdims=True)

    # TODO(synk): training-mode attention dropout (stateful PRNG) not implemented;
    # eval mode == identity.
    ctx = lax.dot_general(e.astype(jnp.bfloat16), v, (((2,), (1,)), ((0,), (0,))),
                          preferred_element_type=jnp.float32)              # (Bblk,S,Dp)
    ctx = ctx * pl.reciprocal(denom, approx=True)

    # Residual read straight from the VMEM-resident input block (no long-lived copy).
    h = ctx + x_ref[...].astype(jnp.float32)

    # LayerNorm over the REAL d_model.  Padded feature columns of h are exactly 0,
    # so sums over Dp equal sums over d_real; var = E[h^2] - mu^2 stays exact.
    inv_d = 1.0 / d_real
    mu = jnp.sum(h, axis=-1, keepdims=True) * inv_d
    msq = jnp.sum(h * h, axis=-1, keepdims=True) * inv_d
    var = msq - mu * mu
    inv = lax.rsqrt(var + eps)
    gamma = gamma_ref[...].reshape(1, 1, Dp)
    beta = beta_ref[...].reshape(1, 1, Dp)
    o_ref[...] = ((h - mu) * inv * gamma + beta).astype(o_ref.dtype)


# --------------------------------------------------------------------------
# Flash-style kernel: grid = (batch_blocks, kv_blocks), online softmax so only an
# (S, tile_kv) score tile is ever live (v7x 64 MiB VMEM safe).
# --------------------------------------------------------------------------
def _flash_attention_ln_kernel(x_q_ref, x_kv_ref, wqkv_ref, gamma_ref, beta_ref,
                               o_ref, q_scr, m_scr, l_scr, acc_scr, *, eps, d_real):
    Bblk, S, Dp = x_q_ref.shape
    Tkv = x_kv_ref.shape[1]
    kv = pl.program_id(1)

    @pl.when(kv == 0)
    def _():
        xm = x_q_ref[...].reshape(Bblk * S, Dp).astype(jnp.bfloat16)
        q = jnp.dot(xm, wqkv_ref[:, 0:Dp], preferred_element_type=jnp.float32)
        q_scr[...] = q.reshape(Bblk, S, Dp).astype(jnp.bfloat16)
        m_scr[...] = jnp.full_like(m_scr, -jnp.inf)
        l_scr[...] = jnp.zeros_like(l_scr)
        acc_scr[...] = jnp.zeros_like(acc_scr)

    # Project this KV tile (fused K|V matmul against the trailing 2Dp of wqkv).
    xkv = x_kv_ref[...].reshape(Bblk * Tkv, Dp).astype(jnp.bfloat16)
    kvp = jnp.dot(xkv, wqkv_ref[:, Dp:3 * Dp], preferred_element_type=jnp.float32)
    kvp = kvp.reshape(Bblk, Tkv, 2 * Dp)
    k = kvp[:, :, 0:Dp].astype(jnp.bfloat16)
    v = kvp[:, :, Dp:2 * Dp].astype(jnp.bfloat16)

    s = lax.dot_general(q_scr[...], k, (((2,), (2,)), ((0,), (0,))),
                        preferred_element_type=jnp.float32)               # (Bblk,S,Tkv)
    m_new = jnp.maximum(m_scr[...], jnp.max(s, axis=-1, keepdims=True))
    alpha = jnp.exp(m_scr[...] - m_new)
    p = jnp.exp(s - m_new)
    l_scr[...] = alpha * l_scr[...] + jnp.sum(p, axis=-1, keepdims=True)
    acc_scr[...] = alpha * acc_scr[...] + lax.dot_general(
        p.astype(jnp.bfloat16), v, (((2,), (1,)), ((0,), (0,))),
        preferred_element_type=jnp.float32)
    m_scr[...] = m_new

    @pl.when(kv == pl.num_programs(1) - 1)
    def _():
        ctx = acc_scr[...] * pl.reciprocal(l_scr[...], approx=True)
        h = ctx + x_q_ref[...].astype(jnp.float32)
        inv_d = 1.0 / d_real
        mu = jnp.sum(h, axis=-1, keepdims=True) * inv_d
        msq = jnp.sum(h * h, axis=-1, keepdims=True) * inv_d
        var = msq - mu * mu
        inv = lax.rsqrt(var + eps)
        gamma = gamma_ref[...].reshape(1, 1, Dp)
        beta = beta_ref[...].reshape(1, 1, Dp)
        o_ref[...] = ((h - mu) * inv * gamma + beta).astype(o_ref.dtype)


# --------------------------------------------------------------------------
# Wrapper
# --------------------------------------------------------------------------
def fast_attention(x, wq, wk, wv, gamma, beta, *, eps=1e-5, block_b=None,
                   flash_seq_threshold=1024, tile_kv=512, force_flash=False):
    """x: (B, S, D); wq/wk/wv: (D_in, D_out); gamma/beta: (1, D)."""
    B, S, D = x.shape
    if S % 8 != 0:
        # TODO(synk): pad S with key masking for non-multiple-of-8 sequence lengths.
        raise NotImplementedError("seq_len must be a multiple of 8")
    scale = 1.0 / math.sqrt(D)

    # ---- host-side one-time prep: lane-dense padding + fused bf16 Wqkv ----
    Dp = max(128, _round_up(D, 128))
    pad_d = Dp - D

    def _pad_w(w):
        w = w.astype(jnp.float32)
        return jnp.pad(w, ((0, pad_d), (0, pad_d))) if pad_d else w

    wqkv = jnp.concatenate([_pad_w(wq) * scale, _pad_w(wk), _pad_w(wv)],
                           axis=1).astype(jnp.bfloat16)                    # (Dp, 3Dp)
    gamma_p = jnp.pad(gamma.reshape(1, D).astype(jnp.float32), ((0, 0), (0, pad_d)))
    beta_p = jnp.pad(beta.reshape(1, D).astype(jnp.float32), ((0, 0), (0, pad_d)))
    x_p = jnp.pad(x, ((0, 0), (0, 0), (0, pad_d))) if pad_d else x

    # ---- choose path ----
    use_flash = bool(force_flash) or S >= flash_seq_threshold
    if use_flash:
        t = max(8, (min(tile_kv, S) // 8) * 8)
        while S % t:          # largest multiple of 8 dividing S (terminates at 8)
            t -= 8
        tile_kv = t

    # ---- VMEM budget → vmem_limit_bytes and block_b ----
    vmem_cap = _vmem_capacity_bytes()
    vmem_limit = max(32 * 2**20, min(int(0.75 * vmem_cap), 100 * 2**20))

    f32b, bf16b = 4, 2
    fixed = Dp * 3 * Dp * bf16b * 2 + 2 * Dp * f32b * 2          # wqkv + gamma/beta
    if use_flash:
        per_b = (2 * S * Dp * f32b                # x_q block (2-buffered)
                 + 2 * tile_kv * Dp * f32b        # x_kv block (2-buffered)
                 + S * Dp * bf16b                 # q scratch
                 + S * Dp * f32b                  # acc scratch
                 + tile_kv * 2 * Dp * f32b + 2 * tile_kv * Dp * bf16b   # k/v proj
                 + 2 * S * tile_kv * f32b         # s, p
                 + 2 * S * Dp * f32b              # out block (2-buffered)
                 + S * Dp * f32b)                 # h
    else:
        per_b = (4 * S * Dp * f32b                # x in + out blocks (2-buffered)
                 + S * 3 * Dp * f32b              # qkv
                 + 3 * S * Dp * bf16b             # q, k, v
                 + 2 * S * S * f32b               # s, e
                 + 2 * S * Dp * f32b)             # ctx, h
    budget = int(0.85 * vmem_limit) - fixed

    if block_b is None:
        cap = max(1, B // 2)   # keep >= 2 grid steps so both v7x TCs get work
        block_b = 1
        for bb in range(1, cap + 1):
            if B % bb == 0 and bb * per_b <= budget:
                block_b = bb
    assert B % block_b == 0, "block_b must divide batch"
    grid_b = B // block_b

    flops = 2 * B * S * Dp * 3 * Dp + 4 * B * S * S * Dp
    cost = pl.CostEstimate(
        flops=int(flops),
        transcendentals=int(B * S * S + B * S),
        bytes_accessed=int(2 * B * S * Dp * 4 + wqkv.size * 2 + 4 * Dp * 4))

    kernel_kwargs = dict(eps=eps, d_real=float(D))

    def _call(use_buffered):
        inv_kwargs = {}
        if use_buffered and hasattr(pl, "Buffered"):
            inv_kwargs = dict(pipeline_mode=pl.Buffered(1))   # don't double-buffer invariants

        if use_flash:
            grid = (grid_b, S // tile_kv)
            kernel = functools.partial(_flash_attention_ln_kernel, **kernel_kwargs)
            in_specs = [
                pl.BlockSpec((block_b, S, Dp), lambda b, kv: (b, 0, 0)),        # x (queries+residual)
                pl.BlockSpec((block_b, tile_kv, Dp), lambda b, kv: (b, kv, 0)),  # x (kv tile)
                pl.BlockSpec((Dp, 3 * Dp), lambda b, kv: (0, 0), **inv_kwargs),
                pl.BlockSpec((1, Dp), lambda b, kv: (0, 0), **inv_kwargs),
                pl.BlockSpec((1, Dp), lambda b, kv: (0, 0), **inv_kwargs),
            ]
            out_specs = pl.BlockSpec((block_b, S, Dp), lambda b, kv: (b, 0, 0))
            scratch = [
                pltpu.VMEM((block_b, S, Dp), jnp.bfloat16),   # q
                pltpu.VMEM((block_b, S, 1), jnp.float32),     # running max
                pltpu.VMEM((block_b, S, 1), jnp.float32),     # running denom
                pltpu.VMEM((block_b, S, Dp), jnp.float32),    # accumulator
            ]
            dims = ("parallel", "arbitrary")
            args = (x_p, x_p, wqkv, gamma_p, beta_p)
        else:
            grid = (grid_b,)
            kernel = functools.partial(_attention_ln_kernel, **kernel_kwargs)
            in_specs = [
                pl.BlockSpec((block_b, S, Dp), lambda b: (b, 0, 0)),
                pl.BlockSpec((Dp, 3 * Dp), lambda b: (0, 0), **inv_kwargs),
                pl.BlockSpec((1, Dp), lambda b: (0, 0), **inv_kwargs),
                pl.BlockSpec((1, Dp), lambda b: (0, 0), **inv_kwargs),
            ]
            out_specs = pl.BlockSpec((block_b, S, Dp), lambda b: (b, 0, 0))
            scratch = []
            dims = ("parallel",)
            args = (x_p, wqkv, gamma_p, beta_p)

        grid_spec = pltpu.PrefetchScalarGridSpec(
            num_scalar_prefetch=0, grid=grid,
            in_specs=in_specs, out_specs=out_specs, scratch_shapes=scratch)

        return pl.pallas_call(
            kernel,
            out_shape=jax.ShapeDtypeStruct((B, S, Dp), x.dtype),
            grid_spec=grid_spec,
            compiler_params=pltpu.CompilerParams(
                dimension_semantics=dims,
                vmem_limit_bytes=vmem_limit),
            cost_estimate=cost,
        )(*args)

    try:
        out_p = _call(True)
    except Exception:
        out_p = _call(False)   # fallback without Buffered(1) pipeline hint

    return out_p[:, :, :D] if pad_d else out_p


# --------------------------------------------------------------------------
# Pure-JAX reference
# --------------------------------------------------------------------------
def reference(x, wq, wk, wv, gamma, beta, eps=1e-5):
    D = x.shape[-1]
    scale = 1.0 / math.sqrt(D)
    q = x @ wq
    k = x @ wk
    v = x @ wv
    scores = jnp.einsum("bqd,bkd->bqk", q, k) * scale
    attn = jax.nn.softmax(scores, axis=-1)
    ctx = jnp.einsum("bqk,bkd->bqd", attn, v)
    h = ctx + x
    mu = jnp.mean(h, axis=-1, keepdims=True)
    var = jnp.mean((h - mu) ** 2, axis=-1, keepdims=True)
    return (h - mu) / jnp.sqrt(var + eps) * gamma[0] + beta[0]


if __name__ == "__main__":
    B, S, D = 2, 8, 32
    key = jax.random.PRNGKey(0)
    kx, kq, kk, kv_, kx2 = jax.random.split(key, 5)

    x = jax.random.normal(kx, (B, S, D), dtype=jnp.float32)

    # Deterministic "Linear" weights in (in, out) layout (PyTorch stores (out, in)
    # and computes x @ W^T; we pre-transpose so the kernel does x @ W).
    bound = 1.0 / math.sqrt(D)
    wq = jax.random.uniform(kq, (D, D), jnp.float32, -bound, bound)
    wk = jax.random.uniform(kk, (D, D), jnp.float32, -bound, bound)
    wv = jax.random.uniform(kv_, (D, D), jnp.float32, -bound, bound)
    gamma = jnp.ones((1, D), jnp.float32)   # LayerNorm weight
    beta = jnp.zeros((1, D), jnp.float32)   # LayerNorm bias

    # Path 1: monolithic kernel (default for small S).
    out = jax.block_until_ready(fast_attention(x, wq, wk, wv, gamma, beta))
    ref = reference(x, wq, wk, wv, gamma, beta)
    assert out.shape == (B, S, D)
    assert jnp.allclose(out, ref, atol=2e-2, rtol=2e-2), "monolithic path mismatch"

    # Path 2: flash-style tiled-KV online-softmax kernel (forced at a small shape).
    B2, S2 = 2, 16
    x2 = jax.random.normal(kx2, (B2, S2, D), dtype=jnp.float32)
    out2 = jax.block_until_ready(
        fast_attention(x2, wq, wk, wv, gamma, beta, force_flash=True, tile_kv=8))
    ref2 = reference(x2, wq, wk, wv, gamma, beta)
    assert out2.shape == (B2, S2, D)
    assert jnp.allclose(out2, ref2, atol=2e-2, rtol=2e-2), "flash path mismatch"

    print("KERNEL_OK")
</pallas_src>

<mosaic_0001>
module attributes {stable_mosaic.version = 11 : i64} {
  func.func @_attention_ln_kernel(%arg0: i32, %arg1: memref<1x8x128xf32, #tpu.memory_space<vmem>>, %arg2: memref<128x384xbf16, #tpu.memory_space<vmem>>, %arg3: memref<1x128xf32, #tpu.memory_space<vmem>>, %arg4: memref<1x128xf32, #tpu.memory_space<vmem>>, %arg5: memref<1x8x128xf32, #tpu.memory_space<vmem>>) attributes {dimension_semantics = [#tpu.dimension_semantics<parallel>], iteration_bounds = array<i64: 2>, scalar_prefetch = 0 : i64, scratch_operands = 0 : i64, tpu.core_type = #tpu.core_type<tc>, window_params = [{transform_indices = @transform_0, window_bounds = array<i64: 1, 8, 128>}, {pipeline_mode = #tpu.pipeline_mode<synchronous>, transform_indices = @transform_1, window_bounds = array<i64: 128, 384>}, {pipeline_mode = #tpu.pipeline_mode<synchronous>, transform_indices = @transform_2, window_bounds = array<i64: 1, 128>}, {pipeline_mode = #tpu.pipeline_mode<synchronous>, transform_indices = @transform_3, window_bounds = array<i64: 1, 128>}, {transform_indices = @transform_4, window_bounds = array<i64: 1, 8, 128>}]} {
    %c0 = arith.constant 0 : index
    %c0_0 = arith.constant 0 : index
    %c0_1 = arith.constant 0 : index
    %0 = vector.load %arg1[%c0, %c0_0, %c0_1] : memref<1x8x128xf32, #tpu.memory_space<vmem>>, vector<1x8x128xf32>
    %1 = vector.shape_cast %0 : vector<1x8x128xf32> to vector<8x128xf32>
    %2 = arith.truncf %1 : vector<8x128xf32> to vector<8x128xbf16>
    %c0_2 = arith.constant 0 : index
    %c0_3 = arith.constant 0 : index
    %3 = vector.load %arg2[%c0_2, %c0_3] : memref<128x384xbf16, #tpu.memory_space<vmem>>, vector<128x384xbf16>
    %cst = arith.constant dense<0.000000e+00> : vector<8x384xf32>
    %4 = tpu.matmul %2, %3, %cst {dimension_numbers = #tpu.dot_dimension_numbers<[1], [0], [0], [1], [0, 0, 1, 1], [], []>} : vector<8x128xbf16>, vector<128x384xbf16>, vector<8x384xf32> -> vector<8x384xf32>
    %5 = vector.shape_cast %4 : vector<8x384xf32> to vector<1x8x384xf32>
    %6 = vector.extract_strided_slice %5 {offsets = [0, 0, 0], sizes = [1, 8, 128], strides = [1, 1, 1]} : vector<1x8x384xf32> to vector<1x8x128xf32>
    %7 = arith.truncf %6 : vector<1x8x128xf32> to vector<1x8x128xbf16>
    %8 = vector.extract_strided_slice %5 {offsets = [0, 0, 128], sizes = [1, 8, 128], strides = [1, 1, 1]} : vector<1x8x384xf32> to vector<1x8x128xf32>
    %9 = arith.truncf %8 : vector<1x8x128xf32> to vector<1x8x128xbf16>
    %10 = vector.extract_strided_slice %5 {offsets = [0, 0, 256], sizes = [1, 8, 128], strides = [1, 1, 1]} : vector<1x8x384xf32> to vector<1x8x128xf32>
    %11 = arith.truncf %10 : vector<1x8x128xf32> to vector<1x8x128xbf16>
    %cst_4 = arith.constant dense<0.000000e+00> : vector<1x8x8xf32>
    %12 = tpu.matmul %7, %9, %cst_4 {dimension_numbers = #tpu.dot_dimension_numbers<[2], [2], [1], [1], [0, 0, 0, 1, 1, 1], [0], [0]>} : vector<1x8x128xbf16>, vector<1x8x128xbf16>, vector<1x8x8xf32> -> vector<1x8x8xf32>
    %cst_5 = arith.constant dense<0xFF800000> : vector<1x8xf32>
    %13 = vector.multi_reduction <maximumf>, %12, %cst_5 [2] : vector<1x8x8xf32> to vector<1x8xf32>
    %14 = vector.shape_cast %13 : vector<1x8xf32> to vector<1x8x1xf32>
    %15 = vector.broadcast %14 : vector<1x8x1xf32> to vector<1x8x8xf32>
    %16 = arith.subf %12, %15 : vector<1x8x8xf32>
    %17 = math.exp %16 : vector<1x8x8xf32>
    %cst_6 = arith.constant dense<0.000000e+00> : vector<1x8xf32>
    %18 = vector.multi_reduction <add>, %17, %cst_6 [2] : vector<1x8x8xf32> to vector<1x8xf32>
    %19 = vector.shape_cast %18 : vector<1x8xf32> to vector<1x8x1xf32>
    %20 = arith.truncf %17 : vector<1x8x8xf32> to vector<1x8x8xbf16>
    %cst_7 = arith.constant dense<0.000000e+00> : vector<1x8x128xf32>
    %21 = tpu.matmul %20, %11, %cst_7 {dimension_numbers = #tpu.dot_dimension_numbers<[2], [1], [1], [2], [0, 0, 0, 1, 1, 2], [0], [0]>} : vector<1x8x8xbf16>, vector<1x8x128xbf16>, vector<1x8x128xf32> -> vector<1x8x128xf32>
    %22 = tpu.reciprocal %19 {approx = true} : vector<1x8x1xf32> -> vector<1x8x1xf32>
    %23 = vector.broadcast %22 : vector<1x8x1xf32> to vector<1x8x128xf32>
    %24 = arith.mulf %21, %23 : vector<1x8x128xf32>
    %c0_8 = arith.constant 0 : index
    %c0_9 = arith.constant 0 : index
    %c0_10 = arith.constant 0 : index
    %25 = vector.load %arg1[%c0_8, %c0_9, %c0_10] : memref<1x8x128xf32, #tpu.memory_space<vmem>>, vector<1x8x128xf32>
    %26 = arith.addf %24, %25 : vector<1x8x128xf32>
    %cst_11 = arith.constant dense<0.000000e+00> : vector<1x8xf32>
    %27 = vector.multi_reduction <add>, %26, %cst_11 [2] : vector<1x8x128xf32> to vector<1x8xf32>
    %28 = vector.shape_cast %27 : vector<1x8xf32> to vector<1x8x1xf32>
    %cst_12 = arith.constant 3.125000e-02 : f32
    %29 = vector.broadcast %cst_12 : f32 to vector<1x8x1xf32>
    %30 = arith.mulf %28, %29 : vector<1x8x1xf32>
    %31 = arith.mulf %26, %26 : vector<1x8x128xf32>
    %cst_13 = arith.constant dense<0.000000e+00> : vector<1x8xf32>
    %32 = vector.multi_reduction <add>, %31, %cst_13 [2] : vector<1x8x128xf32> to vector<1x8xf32>
    %33 = vector.shape_cast %32 : vector<1x8xf32> to vector<1x8x1xf32>
    %cst_14 = arith.constant 3.125000e-02 : f32
    %34 = vector.broadcast %cst_14 : f32 to vector<1x8x1xf32>
    %35 = arith.mulf %33, %34 : vector<1x8x1xf32>
    %36 = arith.mulf %30, %30 : vector<1x8x1xf32>
    %37 = arith.subf %35, %36 : vector<1x8x1xf32>
    %cst_15 = arith.constant 9.99999974E-6 : f32
    %38 = vector.broadcast %cst_15 : f32 to vector<1x8x1xf32>
    %39 = arith.addf %37, %38 : vector<1x8x1xf32>
    %40 = math.rsqrt %39 : vector<1x8x1xf32>
    %c0_16 = arith.constant 0 : index
    %c0_17 = arith.constant 0 : index
    %41 = vector.load %arg3[%c0_16, %c0_17] : memref<1x128xf32, #tpu.memory_space<vmem>>, vector<1x128xf32>
    %42 = vector.shape_cast %41 : vector<1x128xf32> to vector<1x1x128xf32>
    %c0_18 = arith.constant 0 : index
    %c0_19 = arith.constant 0 : index
    %43 = vector.load %arg4[%c0_18, %c0_19] : memref<1x128xf32, #tpu.memory_space<vmem>>, vector<1x128xf32>
    %44 = vector.shape_cast %43 : vector<1x128xf32> to vector<1x1x128xf32>
    %45 = vector.broadcast %30 : vector<1x8x1xf32> to vector<1x8x128xf32>
    %46 = arith.subf %26, %45 : vector<1x8x128xf32>
    %47 = vector.broadcast %40 : vector<1x8x1xf32> to vector<1x8x128xf32>
    %48 = arith.mulf %46, %47 : vector<1x8x128xf32>
    %49 = vector.broadcast %42 : vector<1x1x128xf32> to vector<1x8x128xf32>
    %50 = arith.mulf %48, %49 : vector<1x8x128xf32>
    %51 = vector.broadcast %44 : vector<1x1x128xf32> to vector<1x8x128xf32>
    %52 = arith.addf %50, %51 : vector<1x8x128xf32>
    %c0_20 = arith.constant 0 : index
    %c0_21 = arith.constant 0 : index
    %c0_22 = arith.constant 0 : index
    %53 = vector.load %arg5[%c0_20, %c0_21, %c0_22] : memref<1x8x128xf32, #tpu.memory_space<vmem>>, vector<1x8x128xf32>
    tpu.vector_store %arg5[%c0_20, %c0_21, %c0_22], %52 {strides = array<i32>} : memref<1x8x128xf32, #tpu.memory_space<vmem>>, vector<1x8x128xf32>,
    return
  }
  func.func @transform_0(%arg0: i32) -> (i32, i32, i32) {
    %c0_i32 = arith.constant 0 : i32
    %c0_i32_0 = arith.constant 0 : i32
    %c0_i32_1 = arith.constant 0 : i32
    return %arg0, %c0_i32, %c0_i32_0 : i32, i32, i32
  }
  func.func @transform_1(%arg0: i32) -> (i32, i32) {
    %c0_i32 = arith.constant 0 : i32
    %c0_i32_0 = arith.constant 0 : i32
    %c0_i32_1 = arith.constant 0 : i32
    return %c0_i32, %c0_i32_0 : i32, i32
  }
  func.func @transform_2(%arg0: i32) -> (i32, i32) {
    %c0_i32 = arith.constant 0 : i32
    %c0_i32_0 = arith.constant 0 : i32
    %c0_i32_1 = arith.constant 0 : i32
    return %c0_i32, %c0_i32_0 : i32, i32
  }
  func.func @transform_3(%arg0: i32) -> (i32, i32) {
    %c0_i32 = arith.constant 0 : i32
    %c0_i32_0 = arith.constant 0 : i32
    %c0_i32_1 = arith.constant 0 : i32
    return %c0_i32, %c0_i32_0 : i32, i32
  }
  func.func @transform_4(%arg0: i32) -> (i32, i32, i32) {
    %c0_i32 = arith.constant 0 : i32
    %c0_i32_0 = arith.constant 0 : i32
    %c0_i32_1 = arith.constant 0 : i32
    return %arg0, %c0_i32, %c0_i32_0 : i32, i32, i32
  }
}

module attributes {stable_mosaic.version = 11 : i64} {
  func.func @_attention_ln_kernel(%arg0: i32, %arg1: memref<1x8x128xf32, #tpu.memory_space<vmem>>, %arg2: memref<128x384xbf16, #tpu.memory_space<vmem>>, %arg3: memref<1x128xf32, #tpu.memory_space<vmem>>, %arg4: memref<1x128xf32, #tpu.memory_space<vmem>>, %arg5: memref<1x8x128xf32, #tpu.memory_space<vmem>>) attributes {dimension_semantics = [#tpu.dimension_semantics<parallel>], iteration_bounds = array<i64: 2>, scalar_prefetch = 0 : i64, scratch_operands = 0 : i64, tpu.core_type = #tpu.core_type<tc>, window_params = [{transform_indices = @transform_0, window_bounds = array<i64: 1, 8, 128>}, {pipeline_mode = #tpu.pipeline_mode<synchronous>, transform_indices = @transform_1, window_bounds = array<i64: 128, 384>}, {pipeline_mode = #tpu.pipeline_mode<synchronous>, transform_indices = @transform_2, window_bounds = array<i64: 1, 128>}, {pipeline_mode = #tpu.pipeline_mode<synchronous>, transform_indices = @transform_3, window_bounds = array<i64: 1, 128>}, {transform_indices = @transform_4, window_bounds = array<i64: 1, 8, 128>}]} {
    %c0 = arith.constant 0 : index
    %c0_0 = arith.constant 0 : index
    %c0_1 = arith.constant 0 : index
    %0 = vector.load %arg1[%c0, %c0_0, %c0_1] : memref<1x8x128xf32, #tpu.memory_space<vmem>>, vector<1x8x128xf32>
    %1 = vector.shape_cast %0 : vector<1x8x128xf32> to vector<8x128xf32>
    %2 = arith.truncf %1 : vector<8x128xf32> to vector<8x128xbf16>
    %c0_2 = arith.constant 0 : index
    %c0_3 = arith.constant 0 : index
    %3 = vector.load %arg2[%c0_2, %c0_3] : memref<128x384xbf16, #tpu.memory_space<vmem>>, vector<128x384xbf16>
    %cst = arith.constant dense<0.000000e+00> : vector<8x384xf32>
    %4 = tpu.matmul %2, %3, %cst {dimension_numbers = #tpu.dot_dimension_numbers<[1], [0], [0], [1], [0, 0, 1, 1], [], []>} : vector<8x128xbf16>, vector<128x384xbf16>, vector<8x384xf32> -> vector<8x384xf32>
    %5 = vector.shape_cast %4 : vector<8x384xf32> to vector<1x8x384xf32>
    %6 = vector.extract_strided_slice %5 {offsets = [0, 0, 0], sizes = [1, 8, 128], strides = [1, 1, 1]} : vector<1x8x384xf32> to vector<1x8x128xf32>
    %7 = arith.truncf %6 : vector<1x8x128xf32> to vector<1x8x128xbf16>
    %8 = vector.extract_strided_slice %5 {offsets = [0, 0, 128], sizes = [1, 8, 128], strides = [1, 1, 1]} : vector<1x8x384xf32> to vector<1x8x128xf32>
    %9 = arith.truncf %8 : vector<1x8x128xf32> to vector<1x8x128xbf16>
    %10 = vector.extract_strided_slice %5 {offsets = [0, 0, 256], sizes = [1, 8, 128], strides = [1, 1, 1]} : vector<1x8x384xf32> to vector<1x8x128xf32>
    %11 = arith.truncf %10 : vector<1x8x128xf32> to vector<1x8x128xbf16>
    %cst_4 = arith.constant dense<0.000000e+00> : vector<1x8x8xf32>
    %12 = tpu.matmul %7, %9, %cst_4 {dimension_numbers = #tpu.dot_dimension_numbers<[2], [2], [1], [1], [0, 0, 0, 1, 1, 1], [0], [0]>} : vector<1x8x128xbf16>, vector<1x8x128xbf16>, vector<1x8x8xf32> -> vector<1x8x8xf32>
    %cst_5 = arith.constant dense<0xFF800000> : vector<1x8xf32>
    %13 = vector.multi_reduction <maximumf>, %12, %cst_5 [2] : vector<1x8x8xf32> to vector<1x8xf32>
    %14 = vector.shape_cast %13 : vector<1x8xf32> to vector<1x8x1xf32>
    %15 = vector.broadcast %14 : vector<1x8x1xf32> to vector<1x8x8xf32>
    %16 = arith.subf %12, %15 : vector<1x8x8xf32>
    %17 = math.exp %16 : vector<1x8x8xf32>
    %cst_6 = arith.constant dense<0.000000e+00> : vector<1x8xf32>
    %18 = vector.multi_reduction <add>, %17, %cst_6 [2] : vector<1x8x8xf32> to vector<1x8xf32>
    %19 = vector.shape_cast %18 : vector<1x8xf32> to vector<1x8x1xf32>
    %20 = arith.truncf %17 : vector<1x8x8xf32> to vector<1x8x8xbf16>
    %cst_7 = arith.constant dense<0.000000e+00> : vector<1x8x128xf32>
    %21 = tpu.matmul %20, %11, %cst_7 {dimension_numbers = #tpu.dot_dimension_numbers<[2], [1], [1], [2], [0, 0, 0, 1, 1, 2], [0], [0]>} : vector<1x8x8xbf16>, vector<1x8x128xbf16>, vector<1x8x128xf32> -> vector<1x8x128xf32>
    %22 = tpu.reciprocal %19 {approx = true} : vector<1x8x1xf32> -> vector<1x8x1xf32>
    %23 = vector.broadcast %22 : vector<1x8x1xf32> to vector<1x8x128xf32>
    %24 = arith.mulf %21, %23 : vector<1x8x128xf32>
    %c0_8 = arith.constant 0 : index
    %c0_9 = arith.constant 0 : index
    %c0_10 = arith.constant 0 : index
    %25 = vector.load %arg1[%c0_8, %c0_9, %c0_10] : memref<1x8x128xf32, #tpu.memory_space<vmem>>, vector<1x8x128xf32>
    %26 = arith.addf %24, %25 : vector<1x8x128xf32>
    %cst_11 = arith.constant dense<0.000000e+00> : vector<1x8xf32>
    %27 = vector.multi_reduction <add>, %26, %cst_11 [2] : vector<1x8x128xf32> to vector<1x8xf32>
    %28 = vector.shape_cast %27 : vector<1x8xf32> to vector<1x8x1xf32>
    %cst_12 = arith.constant 3.125000e-02 : f32
    %29 = vector.broadcast %cst_12 : f32 to vector<1x8x1xf32>
    %30 = arith.mulf %28, %29 : vector<1x8x1xf32>
    %31 = arith.mulf %26, %26 : vector<1x8x128xf32>
    %cst_13 = arith.constant dense<0.000000e+00> : vector<1x8xf32>
    %32 = vector.multi_reduction <add>, %31, %cst_13 [2] : vector<1x8x128xf32> to vector<1x8xf32>
    %33 = vector.shape_cast %32 : vector<1x8xf32> to vector<1x8x1xf32>
    %cst_14 = arith.constant 3.125000e-02 : f32
    %34 = vector.broadcast %cst_14 : f32 to vector<1x8x1xf32>
    %35 = arith.mulf %33, %34 : vector<1x8x1xf32>
    %36 = arith.mulf %30, %30 : vector<1x8x1xf32>
    %37 = arith.subf %35, %36 : vector<1x8x1xf32>
    %cst_15 = arith.constant 9.99999974E-6 : f32
    %38 = vector.broadcast %cst_15 : f32 to vector<1x8x1xf32>
    %39 = arith.addf %37, %38 : vector<1x8x1xf32>
    %40 = math.rsqrt %39 : vector<1x8x1xf32>
    %c0_16 = arith.constant 0 : index
    %c0_17 = arith.constant 0 : index
    %41 = vector.load %arg3[%c0_16, %c0_17] : memref<1x128xf32, #tpu.memory_space<vmem>>, vector<1x128xf32>
    %42 = vector.shape_cast %41 : vector<1x128xf32> to vector<1x1x128xf32>
    %c0_18 = arith.constant 0 : index
    %c0_19 = arith.constant 0 : index
    %43 = vector.load %arg4[%c0_18, %c0_19] : memref<1x128xf32, #tpu.memory_space<vmem>>, vector<1x128xf32>
    %44 = vector.shape_cast %43 : vector<1x128xf32> to vector<1x1x128xf32>
    %45 = vector.broadcast %30 : vector<1x8x1xf32> to vector<1x8x128xf32>
    %46 = arith.subf %26, %45 : vector<1x8x128xf32>
    %47 = vector.broadcast %40 : vector<1x8x1xf32> to vector<1x8x128xf32>
    %48 = arith.mulf %46, %47 : vector<1x8x128xf32>
    %49 = vector.broadcast %42 : vector<1x1x128xf32> to vector<1x8x128xf32>
    %50 = arith.mulf %48, %49 : vector<1x8x128xf32>
    %51 = vector.broadcast %44 : vector<1x1x128xf32> to vector<1x8x128xf32>
    %52 = arith.addf %50, %51 : vector<1x8x128xf32>
    %c0_20 = arith.constant 0 : index
    %c0_21 = arith.constant 0 : index
    %c0_22 = arith.constant 0 : index
    %53 = vector.load %arg5[%c0_20, %c0_21, %c0_22] : memref<1x8x128xf32, #tpu.memory_space<vmem>>, vector<1x8x128xf32>
    tpu.vector_store %arg5[%c0_20, %c0_21, %c0_22], %52 {strides = array<i32>} : memref<1x8x128xf32, #tpu.memory_space<vmem>>, vector<1x8x128xf32>,
    return
  }
  func.func @transform_0(%arg0: i32) -> (i32, i32, i32) {
    %c0_i32 = arith.constant 0 : i32
    %c0_i32_0 = arith.constant 0 : i32
    %c0_i32_1 = arith.constant 0 : i32
    return %arg0, %c0_i32, %c0_i32_0 : i32, i32, i32
  }
  func.func @transform_1(%arg0: i32) -> (i32, i32) {
    %c0_i32 = arith.constant 0 : i32
    %c0_i32_0 = arith.constant 0 : i32
    %c0_i32_1 = arith.constant 0 : i32
    return %c0_i32, %c0_i32_0 : i32, i32
  }
  func.func @transform_2(%arg0: i32) -> (i32, i32) {
    %c0_i32 = arith.constant 0 : i32
    %c0_i32_0 = arith.constant 0 : i32
    %c0_i32_1 = arith.constant 0 : i32
    return %c0_i32, %c0_i32_0 : i32, i32
  }
  func.func @transform_3(%arg0: i32) -> (i32, i32) {
    %c0_i32 = arith.constant 0 : i32
    %c0_i32_0 = arith.constant 0 : i32
    %c0_i32_1 = arith.constant 0 : i32
    return %c0_i32, %c0_i32_0 : i32, i32
  }
  func.func @transform_4(%arg0: i32) -> (i32, i32, i32) {
    %c0_i32 = arith.constant 0 : i32
    %c0_i32_0 = arith.constant 0 : i32
    %c0_i32_1 = arith.constant 0 : i32
    return %arg0, %c0_i32, %c0_i32_0 : i32, i32, i32
  }
}

</mosaic_0001>

<llo_original>
// kernel: tpu_custom_call.1
$region0: #{tpu_custom_call.1}
  #allocation0 [shape = 'u32[]', space=smem, size = 0x4, offset = 0x4, fixed_abs, tag = 'smem constant byte address 0x4 - core index']
  #allocation1 [shape = 'u32[144,128]{1,0:T(1,128)}', space=vmem, size = 0x12000, scoped, tag = 'internal scratch']
  %s0 = inlined_call_operand.hbm [shape: f32[2,8,128], index: 0, kind: input, shape index: {}]
  %s1 = inlined_call_operand.hbm [shape: bf16[128,384], index: 1, kind: input, shape index: {}]
  %s2 = inlined_call_operand.vmem [shape: f32[1,128], index: 2, kind: input, shape index: {}]
  %s3 = inlined_call_operand.vmem [shape: f32[1,128], index: 3, kind: input, shape index: {}]
  %s4 = inlined_call_operand.hbm [shape: f32[2,8,128], index: 4, kind: output, shape index: {}]
  %s5 = sld [smem:[#allocation0]]
  $region57: #{tpu_custom_call.1} parent=0
    _
  %s7 = ssub.s32 1, %s5
  %s8 = scalar_select 0, %s7, %s5
  $region1: #{tpu_custom_call.1} parent=0
    #allocation2 [shape = 'u8[8192]{0}', space=vmem, size = 0x2000, scoped, tag = 'input window, operand 0']
    #allocation3 [shape = 's32[2]{0}', space=sflag, size = 0x8, scoped, tag = 'scoped memory for tpu_custom_call.1']
    #allocation4 [shape = 's32[2]{0}', space=sflag, size = 0x8, scoped, tag = 'scoped memory for tpu_custom_call.1']
    #allocation5 [shape = 'u8[98304]{0}', space=vmem, size = 0x18000, scoped, tag = 'input window, operand 1, single buffered']
    #allocation6 [shape = 's32[1]{0}', space=sflag, size = 0x4, scoped, tag = 'scoped memory for tpu_custom_call.1']
    #allocation7 [shape = 'u8[8192]{0}', space=vmem, size = 0x2000, scoped, tag = 'output window, operand 0']
    %9 = vsyncpa [#allocation3], 0
    %s10 = scalar_lea.sflag [#allocation3], 1
    %11 = vsyncpa %s10, 0
    %12 = vsyncpa [#allocation6], 0
    %13 = vsyncpa [#allocation4], 0
    %s14 = scalar_lea.sflag [#allocation4], 1
    %15 = vsyncpa %s14, 0
    loop: start=0, step=1, limit=4
    $region2: #{tpu_custom_call.1} parent=1 // loop_pre_header
      _
    $region3: #{tpu_custom_call.1} parent=1 // loop_header
      %s17 = sphi 0, %s21
      %p18 = scmp.ge.s32.totalorder %s17, 4
      %s27 = sphi 0, %s29
      %s30 = sphi 0, %s27
      %s31 = sphi 0, %s30
      %s47 = sphi 0, %s31
      %s51 = sphi 0, %s51
      %s53 = sphi 0, %s51
      %s54 = sphi 0, %s53
      %s68 = sphi 0, %s54
      %s72 = sphi 0, %s72
      %s74 = sphi 0, %s72
      %s75 = sphi 0, %s74
      %s89 = sphi 0, %s75
      %s93 = sphi 0, %s93
      %s95 = sphi 0, %s93
      %s96 = sphi 0, %s95
      %s110 = sphi 0, %s96
      %s116 = sphi 0, %s118
      %s119 = sphi 0, %s116
      %s120 = sphi 0, %s119
      %s136 = sphi 0, %s120
    $region4: #{tpu_custom_call.1} parent=1 // loop_header_branch
      %20 = sbr.rel (%p18) target = $region8
    $region5: #{tpu_custom_call.1} parent=1 // loop_body
      %s22 = ssub.s32 %s17, 1
      %s23 = ssub.s32 %s17, 2
      %s24 = sadd.s32 %s17, 1
      %s25 = ssub.s32 %s17, %s24
      %p26 = scmp.eq.s32.totalorder %s25, 0
      %s28 = sadd.s32 %s27, 1
      %s29 = scalar_select %p26, %s27, %s28
      %p32 = pneg %p26
      %p33 = scmp.eq.s32.totalorder %s17, 1
      %p34 = por %p32, %p33
      %p35 = scmp.ne.s32.totalorder %s27, %s30
      %p36 = scmp.eq.s32.totalorder %s17, 0
      %p37 = por %p35, %p36
      %p38 = scmp.ne.s32.totalorder %s27, %s30
      %p39 = scmp.eq.s32.totalorder %s22, 1
      %p40 = por %p38, %p39
      %p41 = scmp.ne.s32.totalorder %s30, %s31
      %p42 = scmp.eq.s32.totalorder %s22, 0
      %p43 = por %p41, %p42
      %p44 = scmp.ne.s32.totalorder %s30, %s31
      %p45 = scmp.eq.s32.totalorder %s23, 1
      %p46 = por %p44, %p45
      %p48 = scmp.ne.s32.totalorder %s31, %s47
      %p49 = scmp.eq.s32.totalorder %s23, 0
      %p50 = por %p48, %p49
      %s52 = sadd.s32 %s51, 1
      %p55 = scmp.eq.s32.totalorder %s17, 1
      %p56 = scmp.ne.s32.totalorder %s51, %s53
      %p57 = scmp.eq.s32.totalorder %s17, 0
      %p58 = por %p56, %p57
      %p59 = scmp.ne.s32.totalorder %s51, %s53
      %p60 = scmp.eq.s32.totalorder %s22, 1
      %p61 = por %p59, %p60
      %p62 = scmp.ne.s32.totalorder %s53, %s54
      %p63 = scmp.eq.s32.totalorder %s22, 0
      %p64 = por %p62, %p63
      %p65 = scmp.ne.s32.totalorder %s53, %s54
      %p66 = scmp.eq.s32.totalorder %s23, 1
      %p67 = por %p65, %p66
      %p69 = scmp.ne.s32.totalorder %s54, %s68
      %p70 = scmp.eq.s32.totalorder %s23, 0
      %p71 = por %p69, %p70
      %s73 = sadd.s32 %s72, 1
      %p76 = scmp.eq.s32.totalorder %s17, 1
      %p77 = scmp.ne.s32.totalorder %s72, %s74
      %p78 = scmp.eq.s32.totalorder %s17, 0
      %p79 = por %p77, %p78
      %p80 = scmp.ne.s32.totalorder %s72, %s74
      %p81 = scmp.eq.s32.totalorder %s22, 1
      %p82 = por %p80, %p81
      %p83 = scmp.ne.s32.totalorder %s74, %s75
      %p84 = scmp.eq.s32.totalorder %s22, 0
      %p85 = por %p83, %p84
      %p86 = scmp.ne.s32.totalorder %s74, %s75
      %p87 = scmp.eq.s32.totalorder %s23, 1
      %p88 = por %p86, %p87
      %p90 = scmp.ne.s32.totalorder %s75, %s89
      %p91 = scmp.eq.s32.totalorder %s23, 0
      %p92 = por %p90, %p91
      %s94 = sadd.s32 %s93, 1
      %p97 = scmp.eq.s32.totalorder %s17, 1
      %p98 = scmp.ne.s32.totalorder %s93, %s95
      %p99 = scmp.eq.s32.totalorder %s17, 0
      %p100 = por %p98, %p99
      %p101 = scmp.ne.s32.totalorder %s93, %s95
      %p102 = scmp.eq.s32.totalorder %s22, 1
      %p103 = por %p101, %p102
      %p104 = scmp.ne.s32.totalorder %s95, %s96
      %p105 = scmp.eq.s32.totalorder %s22, 0
      %p106 = por %p104, %p105
      %p107 = scmp.ne.s32.totalorder %s95, %s96
      %p108 = scmp.eq.s32.totalorder %s23, 1
      %p109 = por %p107, %p108
      %p111 = scmp.ne.s32.totalorder %s96, %s110
      %p112 = scmp.eq.s32.totalorder %s23, 0
      %p113 = por %p111, %p112
      %s114 = ssub.s32 %s17, %s24
      %p115 = scmp.eq.s32.totalorder %s114, 0
      %s117 = sadd.s32 %s116, 1
      %s118 = scalar_select %p115, %s116, %s117
      %p121 = pneg %p115
      %p122 = scmp.eq.s32.totalorder %s17, 1
      %p123 = por %p121, %p122
      %p124 = scmp.ne.s32.totalorder %s116, %s119
      %p125 = scmp.eq.s32.totalorder %s17, 0
      %p126 = por %p124, %p125
      %p127 = scmp.ne.s32.totalorder %s116, %s119
      %p128 = scmp.eq.s32.totalorder %s22, 1
      %p129 = por %p127, %p128
      %p130 = scmp.ne.s32.totalorder %s119, %s120
      %p131 = scmp.eq.s32.totalorder %s22, 0
      %p132 = por %p130, %p131
      %p133 = scmp.ne.s32.totalorder %s119, %s120
      %p134 = scmp.eq.s32.totalorder %s23, 1
      %p135 = por %p133, %p134
      %p137 = scmp.ne.s32.totalorder %s120, %s136
      %p138 = scmp.eq.s32.totalorder %s23, 0
      %p139 = por %p137, %p138
      %p140 = scmp.le.s32.totalorder 1, %s17
      %p141 = scmp.lt.s32.totalorder %s17, 3
      %p142 = pnand %p140, %p141
      %p143 = pneg %p142
      // Predicated region
      $region9: #{tpu_custom_call.1} parent=5 // pred_check
        _
      $region10: #{tpu_custom_call.1} parent=5 // pred_check_branch
        %145 = sbr.rel (%p142) target = $region12
      $region11: #{tpu_custom_call.1} parent=5 // pred_region
        %s146 = ssub.s32 %s17, 1
        // Predicated region
        $region13: #{tpu_custom_call.1} parent=11 // pred_check
          %p147 = pneg %p64
        $region14: #{tpu_custom_call.1} parent=11 // pred_check_branch
          %149 = sbr.rel (%p147) target = $region16
        $region15: #{tpu_custom_call.1} parent=11 // pred_region
          %s151 = ssub.s32 3072, 3072
          %152 = vsyncadd [#allocation6], %s151
          %s153 = sshll.u32 [#allocation5], 4
          %s154 = int_to_ptr.vmem [resolvable:$true] %s153
          %159 = dma.hbm_to_vmem [thread:$0]  %s1, 3072, %s154, [#allocation6], 192, 192, 12
        $region16: #{tpu_custom_call.1} parent=11 // pred_fallthru
          _
        // Predicated region
        $region17: #{tpu_custom_call.1} parent=11 // pred_check
          %p160 = pneg %p85
        $region18: #{tpu_custom_call.1} parent=11 // pred_check_branch
          %162 = sbr.rel (%p160) target = $region20
        $region19: #{tpu_custom_call.1} parent=11 // pred_region
          _
        $region20: #{tpu_custom_call.1} parent=11 // pred_fallthru
          _
        // Predicated region
        $region21: #{tpu_custom_call.1} parent=11 // pred_check
          %p163 = pneg %p106
        $region22: #{tpu_custom_call.1} parent=11 // pred_check_branch
          %165 = sbr.rel (%p163) target = $region24
        $region23: #{tpu_custom_call.1} parent=11 // pred_region
          _
        $region24: #{tpu_custom_call.1} parent=11 // pred_fallthru
          _
      $region12: #{tpu_custom_call.1} parent=5 // pred_fallthru
        _
      %p166 = scmp.lt.s32.totalorder %s17, 2
      // Predicated region
      $region25: #{tpu_custom_call.1} parent=5 // pred_check
        %p167 = pneg %p166
      $region26: #{tpu_custom_call.1} parent=5 // pred_check_branch
        %169 = sbr.rel (%p167) target = $region28
      $region27: #{tpu_custom_call.1} parent=5 // pred_region
        // Predicated region
        $region29: #{tpu_custom_call.1} parent=27 // pred_check
          %p170 = pneg %p37
        $region30: #{tpu_custom_call.1} parent=27 // pred_check_branch
          %172 = sbr.rel (%p170) target = $region32
        $region31: #{tpu_custom_call.1} parent=27 // pred_region
          %s173 = sand.u32 %s27, 1
          %s174 = scalar_lea.sflag [#allocation3], %s173
          %s175 = sand.u32 %s27, 1
          %s176 = smul.addr %s175, 8
          %s177 = scalar_lea.vmem [#allocation2], %s176
          %s179 = ssub.s32 128, 128
          %180 = vsyncadd %s174, %s179
          %s181 = smul.addr %s17, 128
          %s182 = scalar_lea.hbm %s0, %s181
          %s184 = sshll.u32 %s177, 4
          %s185 = int_to_ptr.vmem [resolvable:$true] %s184
          %187 = dma.hbm_to_vmem [thread:$0]  %s182, 128, %s185, %s174
        $region32: #{tpu_custom_call.1} parent=27 // pred_fallthru
          _
      $region28: #{tpu_custom_call.1} parent=5 // pred_fallthru
        _
      %p188 = scmp.le.s32.totalorder 1, %s17
      %p189 = scmp.lt.s32.totalorder %s17, 3
      %p190 = pnand %p188, %p189
      %p191 = pneg %p190
      // Predicated region
      $region33: #{tpu_custom_call.1} parent=5 // pred_check
        _
      $region34: #{tpu_custom_call.1} parent=5 // pred_check_branch
        %193 = sbr.rel (%p190) target = $region36
      $region35: #{tpu_custom_call.1} parent=5 // pred_region
        %s194 = ssub.s32 %s17, 1
        %s195 = sand.u32 %s30, 1
        %s196 = scalar_lea.sflag [#allocation3], %s195
        %s197 = sand.u32 %s30, 1
        %s198 = smul.addr %s197, 8
        %s199 = scalar_lea.vmem [#allocation2], %s198
        // Predicated region
        $region37: #{tpu_custom_call.1} parent=35 // pred_check
          %p200 = pneg %p43
        $region38: #{tpu_custom_call.1} parent=35 // pred_check_branch
          %202 = sbr.rel (%p200) target = $region40
        $region39: #{tpu_custom_call.1} parent=35 // pred_region
          %203 = dma.done %s196, 128
        $region40: #{tpu_custom_call.1} parent=35 // pred_fallthru
          _
        // Predicated region
        $region41: #{tpu_custom_call.1} parent=35 // pred_check
          %p204 = pneg %p64
        $region42: #{tpu_custom_call.1} parent=35 // pred_check_branch
          %206 = sbr.rel (%p204) target = $region44
        $region43: #{tpu_custom_call.1} parent=35 // pred_region
          %207 = dma.done [#allocation6], 3072
        $region44: #{tpu_custom_call.1} parent=35 // pred_fallthru
          _
        %s208 = sand.u32 %s30, 1
        %s209 = scalar_lea.sflag [#allocation3], %s208
        %s210 = sand.u32 %s30, 1
        %s211 = smul.addr %s210, 8
        %s212 = scalar_lea.vmem [#allocation2], %s211
        %p213 = pneg %p43
        %p214 = pneg %p40
        %p215 = pneg %p64
        %p216 = pneg %p61
        %p217 = pneg %p85
        %p218 = pneg %p82
        %p219 = pneg %p106
        %p220 = pneg %p103
        %p221 = pneg %p132
        %p222 = pneg %p129
        %s223 = sand.u32 %s119, 1
        %s224 = scalar_lea.sflag [#allocation4], %s223
        %s225 = sand.u32 %s119, 1
        %s226 = smul.addr %s225, 8
        %s227 = scalar_lea.vmem [#allocation7], %s226
        %v229 = vld [vmem:[%s199] sm:$0xff]
        %v230 = vpack.c.bf16 %v229, %v229
        %v231 = vld [vmem:[#allocation5] sm:$0xff]
        %v232 = vld [vmem:[#allocation5 + $0x8] sm:$0xf]
        %v233 = vld [vmem:[#allocation5 + $0xc] sm:$0xff]
        %v234 = vld [vmem:[#allocation5 + $0x14] sm:$0xf]
        %v235 = vld [vmem:[#allocation5 + $0x18] sm:$0xff]
        %v236 = vld [vmem:[#allocation5 + $0x20] sm:$0xf]
        %v237 = vld [vmem:[#allocation5 + $0x24] sm:$0xff]
        %v238 = vld [vmem:[#allocation5 + $0x2c] sm:$0xf]
        %v239 = vld [vmem:[#allocation5 + $0x30] sm:$0xff]
        %v240 = vld [vmem:[#allocation5 + $0x38] sm:$0xf]
        %v241 = vld [vmem:[#allocation5 + $0x3c] sm:$0xff]
        %v242 = vld [vmem:[#allocation5 + $0x44] sm:$0xf]
        %v243 = vld [vmem:[#allocation5 + $0x48] sm:$0xff]
        %v244 = vld [vmem:[#allocation5 + $0x50] sm:$0xf]
        %v245 = vld [vmem:[#allocation5 + $0x54] sm:$0xff]
        %v246 = vld [vmem:[#allocation5 + $0x5c] sm:$0xf]
        %v247 = vld [vmem:[#allocation5 + $0x60] sm:$0xff]
        %v248 = vld [vmem:[#allocation5 + $0x68] sm:$0xf]
        %v249 = vld [vmem:[#allocation5 + $0x6c] sm:$0xff]
        %v250 = vld [vmem:[#allocation5 + $0x74] sm:$0xf]
        %v251 = vld [vmem:[#allocation5 + $0x78] sm:$0xff]
        %v252 = vld [vmem:[#allocation5 + $0x80] sm:$0xf]
        %v253 = vld [vmem:[#allocation5 + $0x84] sm:$0xff]
        %v254 = vld [vmem:[#allocation5 + $0x8c] sm:$0xf]
        %v255 = vld [vmem:[#allocation5 + $0x90] sm:$0xff]
        %v256 = vld [vmem:[#allocation5 + $0x98] sm:$0xf]
        %v257 = vld [vmem:[#allocation5 + $0x9c] sm:$0xff]
        %v258 = vld [vmem:[#allocation5 + $0xa4] sm:$0xf]
        %v259 = vld [vmem:[#allocation5 + $0xa8] sm:$0xff]
        %v260 = vld [vmem:[#allocation5 + $0xb0] sm:$0xf]
        %v261 = vld [vmem:[#allocation5 + $0xb4] sm:$0xff]
        %v262 = vld [vmem:[#allocation5 + $0xbc] sm:$0xf]
        %v295 = vunpack.c.l.b16 %v231
        %v296 = vunpack.c.h.b16 %v231
        %v297 = vunpack.c.l.b16 %v232
        %v298 = vunpack.c.l.b16 %v233
        %v299 = vunpack.c.h.b16 %v233
        %v300 = vunpack.c.l.b16 %v234
        %v301 = vunpack.c.l.b16 %v235
        %v302 = vunpack.c.h.b16 %v235
        %v303 = vunpack.c.l.b16 %v236
        %v304 = vunpack.c.l.b16 %v237
        %v305 = vunpack.c.h.b16 %v237
        %v306 = vunpack.c.l.b16 %v238
        %v307 = vunpack.c.l.b16 %v239
        %v308 = vunpack.c.h.b16 %v239
        %v309 = vunpack.c.l.b16 %v240
        %v310 = vunpack.c.l.b16 %v241
        %v311 = vunpack.c.h.b16 %v241
        %v312 = vunpack.c.l.b16 %v242
        %v313 = vunpack.c.l.b16 %v243
        %v314 = vunpack.c.h.b16 %v243
        %v315 = vunpack.c.l.b16 %v244
        %v316 = vunpack.c.l.b16 %v245
        %v317 = vunpack.c.h.b16 %v245
        %v318 = vunpack.c.l.b16 %v246
        %v319 = vunpack.c.l.b16 %v247
        %v320 = vunpack.c.h.b16 %v247
        %v321 = vunpack.c.l.b16 %v248
        %v322 = vunpack.c.l.b16 %v249
        %v323 = vunpack.c.h.b16 %v249
        %v324 = vunpack.c.l.b16 %v250
        %v325 = vunpack.c.l.b16 %v251
        %v326 = vunpack.c.h.b16 %v251
        %v327 = vunpack.c.l.b16 %v252
        %v328 = vunpack.c.l.b16 %v253
        %v329 = vunpack.c.h.b16 %v253
        %v330 = vunpack.c.l.b16 %v254
        %v331 = vunpack.c.l.b16 %v255
        %v332 = vunpack.c.h.b16 %v255
        %v333 = vunpack.c.l.b16 %v256
        %v334 = vunpack.c.l.b16 %v257
        %v335 = vunpack.c.h.b16 %v257
        %v336 = vunpack.c.l.b16 %v258
        %v337 = vunpack.c.l.b16 %v259
        %v338 = vunpack.c.h.b16 %v259
        %v339 = vunpack.c.l.b16 %v260
        %v340 = vunpack.c.l.b16 %v261
        %v341 = vunpack.c.h.b16 %v261
        %v342 = vunpack.c.l.b16 %v262
        %v343 = vpack.c.b16 %v298, %v295
        %v344 = vpack.c.b16 %v299, %v296
        %v345 = vpack.c.b16 %v300, %v297
        %v346 = vpack.c.b16 %v304, %v301
        %v347 = vpack.c.b16 %v305, %v302
        %v348 = vpack.c.b16 %v306, %v303
        %v349 = vpack.c.b16 %v310, %v307
        %v350 = vpack.c.b16 %v311, %v308
        %v351 = vpack.c.b16 %v312, %v309
        %v352 = vpack.c.b16 %v316, %v313
        %v353 = vpack.c.b16 %v317, %v314
        %v354 = vpack.c.b16 %v318, %v315
        %v355 = vpack.c.b16 %v322, %v319
        %v356 = vpack.c.b16 %v323, %v320
        %v357 = vpack.c.b16 %v324, %v321
        %v358 = vpack.c.b16 %v328, %v325
        %v359 = vpack.c.b16 %v329, %v326
        %v360 = vpack.c.b16 %v330, %v327
        %v361 = vpack.c.b16 %v334, %v331
        %v362 = vpack.c.b16 %v335, %v332
        %v363 = vpack.c.b16 %v336, %v333
        %v364 = vpack.c.b16 %v340, %v337
        %v365 = vpack.c.b16 %v341, %v338
        %v366 = vpack.c.b16 %v342, %v339
        %391 = vmatprep.subr.bf16.mxu0 %v344
        %392 = vmatpush1.bf16.msra.mxu0 %v343
        %393 = vmatprep.subr.bf16.mxu0 %v347
        %394 = vmatpush1.bf16.msra.mxu0 %v346
        %395 = vmatprep.subr.bf16.mxu0 %v350
        %396 = vmatpush1.bf16.msra.mxu0 %v349
        %397 = vmatprep.subr.bf16.mxu0 %v353
        %398 = vmatpush1.bf16.msra.mxu0 %v352
        %399 = vmatprep.subr.bf16.mxu0 %v356
        %400 = vmatpush1.bf16.msra.mxu0 %v355
        %401 = vmatprep.subr.bf16.mxu0 %v359
        %402 = vmatpush1.bf16.msra.mxu0 %v358
        %403 = vmatprep.subr.bf16.mxu0 %v362
        %404 = vmatpush1.bf16.msra.mxu0 %v361
        %405 = vmatprep.subr.bf16.mxu0 %v365
        %406 = vmatpush1.bf16.msra.mxu0 %v364
        %407 = vmatprep.subr.bf16.mxu0 0
        %408 = vmatpush1.bf16.msra.mxu0 0
        %409 = vmatprep.subr.bf16.mxu0 0
        %410 = vmatpush1.bf16.msra.mxu0 0
        %411 = vmatprep.subr.bf16.mxu0 0
        %412 = vmatpush1.bf16.msra.mxu0 0
        %413 = vmatprep.subr.bf16.mxu0 0
        %414 = vmatpush1.bf16.msra.mxu0 0
        %415 = vmatprep.subr.bf16.mxu0 0
        %416 = vmatpush1.bf16.msra.mxu0 0
        %417 = vmatprep.subr.bf16.mxu0 0
        %418 = vmatpush1.bf16.msra.mxu0 0
        %419 = vmatprep.subr.bf16.mxu0 0
        %420 = vmatpush1.bf16.msra.mxu0 0
        %421 = vmatprep.subr.bf16.mxu0 0
        %422 = vmatpush1.bf16.msra.mxu0 0
        %423 = vmatprep.mubr.bf16.mxu0 0
        %424 = vmatmul.mubr.bf16.gmra.mrb[0].mxu0 %v230
        %v425 = vpop.f32.mrb[0].mxu0
        %v426 = vadd.f32 0.0, %v425
        %v427 = vpop.f32.mrb[0].mxu0
        %v428 = vadd.f32 0.0, %v427
        %v429 = vpop.f32.mrb[0].mxu0
        %v430 = vpop.f32.mrb[0].mxu0
        %431 = vdwg.mxu0
        %432 = vmatprep.subr.bf16.mxu0 0
        %433 = vmatpush1.bf16.msra.mxu0 %v345
        %434 = vmatprep.subr.bf16.mxu0 0
        %435 = vmatpush1.bf16.msra.mxu0 %v348
        %436 = vmatprep.subr.bf16.mxu0 0
        %437 = vmatpush1.bf16.msra.mxu0 %v351
        %438 = vmatprep.subr.bf16.mxu0 0
        %439 = vmatpush1.bf16.msra.mxu0 %v354
        %440 = vmatprep.subr.bf16.mxu0 0
        %441 = vmatpush1.bf16.msra.mxu0 %v357
        %442 = vmatprep.subr.bf16.mxu0 0
        %443 = vmatpush1.bf16.msra.mxu0 %v360
        %444 = vmatprep.subr.bf16.mxu0 0
        %445 = vmatpush1.bf16.msra.mxu0 %v363
        %446 = vmatprep.subr.bf16.mxu0 0
        %447 = vmatpush1.bf16.msra.mxu0 %v366
        %448 = vmatprep.subr.bf16.mxu0 0
        %449 = vmatpush1.bf16.msra.mxu0 0
        %450 = vmatprep.subr.bf16.mxu0 0
        %451 = vmatpush1.bf16.msra.mxu0 0
        %452 = vmatprep.subr.bf16.mxu0 0
        %453 = vmatpush1.bf16.msra.mxu0 0
        %454 = vmatprep.subr.bf16.mxu0 0
        %455 = vmatpush1.bf16.msra.mxu0 0
        %456 = vmatprep.subr.bf16.mxu0 0
        %457 = vmatpush1.bf16.msra.mxu0 0
        %458 = vmatprep.subr.bf16.mxu0 0
        %459 = vmatpush1.bf16.msra.mxu0 0
        %460 = vmatprep.subr.bf16.mxu0 0
        %461 = vmatpush1.bf16.msra.mxu0 0
        %462 = vmatprep.subr.bf16.mxu0 0
        %463 = vmatpush1.bf16.msra.mxu0 0
        %464 = vmatprep.mubr.bf16.mxu0 0
        %465 = vmatmul.mubr.bf16.gmra.mrb[0].mxu0 %v230
        %v466 = vpop.f32.mrb[0].mxu0
        %v467 = vadd.f32 0.0, %v466
        %v468 = vpop.f32.mrb[0].mxu0
        %v469 = vpop.f32.mrb[0].mxu0
        %v470 = vpop.f32.mrb[0].mxu0
        %471 = vdwg.mxu0
        %v472 = vpack.c.bf16 %v426, %v426
        %v473 = vpack.c.bf16 %v428, %v428
        %v474 = vpack.c.bf16 %v467, %v467
        %475 = vmatprep.subr.bf16.mxu0 0
        %476 = vmatpush1.bf16.xpose.msra.mxu0 %v473
        %477 = vmatprep.subr.bf16.mxu0 0
        %478 = vmatpush1.bf16.xpose.msra.mxu0 0
        %479 = vmatprep.subr.bf16.mxu0 0
        %480 = vmatpush1.bf16.xpose.msra.mxu0 0
        %481 = vmatprep.subr.bf16.mxu0 0
        %482 = vmatpush1.bf16.xpose.msra.mxu0 0
        %483 = vmatprep.subr.bf16.mxu0 0
        %484 = vmatpush1.bf16.xpose.msra.mxu0 0
        %485 = vmatprep.subr.bf16.mxu0 0
        %486 = vmatpush1.bf16.xpose.msra.mxu0 0
        %487 = vmatprep.subr.bf16.mxu0 0
        %488 = vmatpush1.bf16.xpose.msra.mxu0 0
        %489 = vmatprep.subr.bf16.mxu0 0
        %490 = vmatpush1.bf16.xpose.msra.mxu0 0
        %491 = vmatprep.subr.bf16.mxu0 0
        %492 = vmatpush1.bf16.xpose.msra.mxu0 0
        %493 = vmatprep.subr.bf16.mxu0 0
        %494 = vmatpush1.bf16.xpose.msra.mxu0 0
        %495 = vmatprep.subr.bf16.mxu0 0
        %496 = vmatpush1.bf16.xpose.msra.mxu0 0
        %497 = vmatprep.subr.bf16.mxu0 0
        %498 = vmatpush1.bf16.xpose.msra.mxu0 0
        %499 = vmatprep.subr.bf16.mxu0 0
        %500 = vmatpush1.bf16.xpose.msra.mxu0 0
        %501 = vmatprep.subr.bf16.mxu0 0
        %502 = vmatpush1.bf16.xpose.msra.mxu0 0
        %503 = vmatprep.subr.bf16.mxu0 0
        %504 = vmatpush1.bf16.xpose.msra.mxu0 0
        %505 = vmatprep.subr.bf16.mxu0 0
        %506 = vmatpush1.bf16.xpose.msra.mxu0 0
        %507 = vmatprep.mubr.bf16.mxu0 0
        %508 = vmatmul.mubr.bf16.gmra.mrb[0].mxu0 %v472
        %v509 = vpop.f32.mrb[0].mxu0
        %v510 = vadd.f32 0.0, %v509
        %v511 = vpop.f32.mrb[0].mxu0
        %v512 = vpop.f32.mrb[0].mxu0
        %v513 = vpop.f32.mrb[0].mxu0
        %514 = vdwg.mxu0
        %vm515 = vcmask 64512
        %v516 = vsel %vm515, %v510, -inf
        %517 = vmax.xlane.f32.xlu0 %v516
        %v518 = vpop.xlane.xlu0 %517
        %v519 = vsub.f32 %v510, %v518
        %v520 = vmul.f32 %v519, 1.442695
        %v521 = vpow.pop %v520
        %v522 = vsel %vm515, %v521, 0.0
        %523 = vadd.xlane.f32.xlu0 %v522
        %v524 = vpop.xlane.xlu0 %523
        %v525 = vpack.c.bf16 %v521, %v521
        %v527 = vsel %vm515, %v525, 0
        %vm529 = vcmask 1043456
        %v531 = vsel %vm529, %v474, 0
        %533 = vmatprep.subr.bf16.mxu0 0
        %534 = vmatpush1.bf16.msra.mxu0 %v531
        %535 = vmatprep.subr.bf16.mxu0 0
        %536 = vmatpush1.bf16.msra.mxu0 0
        %537 = vmatprep.subr.bf16.mxu0 0
        %538 = vmatpush1.bf16.msra.mxu0 0
        %539 = vmatprep.subr.bf16.mxu0 0
        %540 = vmatpush1.bf16.msra.mxu0 0
        %541 = vmatprep.subr.bf16.mxu0 0
        %542 = vmatpush1.bf16.msra.mxu0 0
        %543 = vmatprep.subr.bf16.mxu0 0
        %544 = vmatpush1.bf16.msra.mxu0 0
        %545 = vmatprep.subr.bf16.mxu0 0
        %546 = vmatpush1.bf16.msra.mxu0 0
        %547 = vmatprep.subr.bf16.mxu0 0
        %548 = vmatpush1.bf16.msra.mxu0 0
        %549 = vmatprep.subr.bf16.mxu0 0
        %550 = vmatpush1.bf16.msra.mxu0 0
        %551 = vmatprep.subr.bf16.mxu0 0
        %552 = vmatpush1.bf16.msra.mxu0 0
        %553 = vmatprep.subr.bf16.mxu0 0
        %554 = vmatpush1.bf16.msra.mxu0 0
        %555 = vmatprep.subr.bf16.mxu0 0
        %556 = vmatpush1.bf16.msra.mxu0 0
        %557 = vmatprep.subr.bf16.mxu0 0
        %558 = vmatpush1.bf16.msra.mxu0 0
        %559 = vmatprep.subr.bf16.mxu0 0
        %560 = vmatpush1.bf16.msra.mxu0 0
        %561 = vmatprep.subr.bf16.mxu0 0
        %562 = vmatpush1.bf16.msra.mxu0 0
        %563 = vmatprep.subr.bf16.mxu0 0
        %564 = vmatpush1.bf16.msra.mxu0 0
        %565 = vmatprep.mubr.bf16.mxu0 0
        %566 = vmatmul.mubr.bf16.gmra.mrb[0].mxu0 %v527
        %v567 = vpop.f32.mrb[0].mxu0
        %v568 = vadd.f32 0.0, %v567
        %v569 = vpop.f32.mrb[0].mxu0
        %v570 = vpop.f32.mrb[0].mxu0
        %v571 = vpop.f32.mrb[0].mxu0
        %572 = vdwg.mxu0
        %v573 = vrcp.pop %v524
        %v574 = vmul.f32 %v568, %v573
        %v575 = vadd.f32 %v574, %v229
        %576 = vadd.xlane.f32.xlu0 %v575
        %v577 = vpop.xlane.xlu0 %576
        %v578 = vmul.f32 %v577, 0.03125
        %v579 = vmul.f32 %v575, %v575
        %580 = vadd.xlane.f32.xlu0 %v579
        %v581 = vpop.xlane.xlu0 %580
        %v582 = vmul.f32 %v581, 0.03125
        %v583 = vmul.f32 %v578, %v578
        %v584 = vsub.f32 %v582, %v583
        %v585 = vadd.f32 %v584, 1e-05
        %v586 = vrsqrt.pop %v585
        %v587 = vld [vmem:[%s2] sm:$0x1]
        %v588 = vld [vmem:[%s3] sm:$0x1]
        %v589 = vsub.f32 %v575, %v578
        %v590 = vmul.f32 %v589, %v586
        %v592 = vlaneseq
        %v593 = vshrl.u32 %v592, 7
        %v594 = vsub.s32 0, %v593
        %v595 = vrot.slane %v587, %v594
        %v597 = vmul.f32 %v590, %v595
        %v599 = vlaneseq
        %v600 = vshrl.u32 %v599, 7
        %v601 = vsub.s32 0, %v600
        %v602 = vrot.slane %v588, %v601
        %v604 = vadd.f32 %v597, %v602
        %605 = vst [vmem:[%s227] sm:$0xff] %v604
        %s606 = sand.u32 %s119, 1
        %s607 = scalar_lea.sflag [#allocation4], %s606
        %s608 = sand.u32 %s119, 1
        %s609 = smul.addr %s608, 8
        %s610 = scalar_lea.vmem [#allocation7], %s609
        // Predicated region
        $region45: #{tpu_custom_call.1} parent=35 // pred_check
          %p611 = pneg %p129
        $region46: #{tpu_custom_call.1} parent=35 // pred_check_branch
          %613 = sbr.rel (%p611) target = $region48
        $region47: #{tpu_custom_call.1} parent=35 // pred_region
          %s615 = ssub.s32 128, 128
          %616 = vsyncadd %s607, %s615
          %s617 = smul.addr %s22, 128
          %s618 = scalar_lea.hbm %s4, %s617
          %s620 = sshll.u32 %s610, 4
          %s621 = int_to_ptr.vmem [resolvable:$true] %s620
          %623 = dma.vmem_to_hbm [thread:$0]  %s621, 128, %s618, %s607
        $region48: #{tpu_custom_call.1} parent=35 // pred_fallthru
          _
      $region36: #{tpu_custom_call.1} parent=5 // pred_fallthru
        _
      %p624 = scmp.le.s32.totalorder 2, %s17
      // Predicated region
      $region49: #{tpu_custom_call.1} parent=5 // pred_check
        %p625 = pneg %p624
      $region50: #{tpu_custom_call.1} parent=5 // pred_check_branch
        %627 = sbr.rel (%p625) target = $region52
      $region51: #{tpu_custom_call.1} parent=5 // pred_region
        %s628 = ssub.s32 %s17, 2
        // Predicated region
        $region53: #{tpu_custom_call.1} parent=51 // pred_check
          %p629 = pneg %p135
        $region54: #{tpu_custom_call.1} parent=51 // pred_check_branch
          %631 = sbr.rel (%p629) target = $region56
        $region55: #{tpu_custom_call.1} parent=51 // pred_region
          %s632 = sand.u32 %s120, 1
          %s633 = scalar_lea.sflag [#allocation4], %s632
          %s634 = sand.u32 %s120, 1
          %s635 = smul.addr %s634, 8
          %s636 = scalar_lea.vmem [#allocation7], %s635
          %637 = dma.done %s633, 128
        $region56: #{tpu_custom_call.1} parent=51 // pred_fallthru
          _
      $region52: #{tpu_custom_call.1} parent=5 // pred_fallthru
        _
    $region6: #{tpu_custom_call.1} parent=1 // loop_footer
      %s21 = sadd.s32 1, %s17
    $region7: #{tpu_custom_call.1} parent=1 // loop_footer_branch
      %16 = sbr.rel target = $region3
    $region8: #{tpu_custom_call.1} parent=1 // loop_exit
      _
    %638 = vsyncpa [#allocation3], 1
    %s639 = scalar_lea.sflag [#allocation3], 1
    %640 = vsyncpa %s639, 1
    %641 = vsyncpa [#allocation6], 1
    %642 = vsyncpa [#allocation4], 1
    %s643 = scalar_lea.sflag [#allocation4], 1
    %644 = vsyncpa %s643, 1

// kernel: tpu_custom_call.1
$region0: #{tpu_custom_call.1}
  #allocation0 [shape = 'u32[]', space=smem, size = 0x4, offset = 0x4, fixed_abs, tag = 'smem constant byte address 0x4 - core index']
  #allocation1 [shape = 'u32[144,128]{1,0:T(1,128)}', space=vmem, size = 0x12000, scoped, tag = 'internal scratch']
  %s0 = inlined_call_operand.hbm [shape: f32[2,8,128], index: 0, kind: input, shape index: {}]
  %s1 = inlined_call_operand.hbm [shape: bf16[128,384], index: 1, kind: input, shape index: {}]
  %s2 = inlined_call_operand.vmem [shape: f32[1,128], index: 2, kind: input, shape index: {}]
  %s3 = inlined_call_operand.vmem [shape: f32[1,128], index: 3, kind: input, shape index: {}]
  %s4 = inlined_call_operand.hbm [shape: f32[2,8,128], index: 4, kind: output, shape index: {}]
  %s5 = sld [smem:[#allocation0]]
  $region57: #{tpu_custom_call.1} parent=0
    _
  %s7 = ssub.s32 1, %s5
  %s8 = scalar_select 0, %s7, %s5
  $region1: #{tpu_custom_call.1} parent=0
    #allocation2 [shape = 'u8[8192]{0}', space=vmem, size = 0x2000, scoped, tag = 'input window, operand 0']
    #allocation3 [shape = 's32[2]{0}', space=sflag, size = 0x8, scoped, tag = 'scoped memory for tpu_custom_call.1']
    #allocation4 [shape = 's32[2]{0}', space=sflag, size = 0x8, scoped, tag = 'scoped memory for tpu_custom_call.1']
    #allocation5 [shape = 'u8[98304]{0}', space=vmem, size = 0x18000, scoped, tag = 'input window, operand 1, single buffered']
    #allocation6 [shape = 's32[1]{0}', space=sflag, size = 0x4, scoped, tag = 'scoped memory for tpu_custom_call.1']
    #allocation7 [shape = 'u8[8192]{0}', space=vmem, size = 0x2000, scoped, tag = 'output window, operand 0']
    %9 = vsyncpa [#allocation3], 0
    %s10 = scalar_lea.sflag [#allocation3], 1
    %11 = vsyncpa %s10, 0
    %12 = vsyncpa [#allocation6], 0
    %13 = vsyncpa [#allocation4], 0
    %s14 = scalar_lea.sflag [#allocation4], 1
    %15 = vsyncpa %s14, 0
    loop: start=0, step=1, limit=4
    $region2: #{tpu_custom_call.1} parent=1 // loop_pre_header
      _
    $region3: #{tpu_custom_call.1} parent=1 // loop_header
      %s17 = sphi 0, %s21
      %p18 = scmp.ge.s32.totalorder %s17, 4
      %s27 = sphi 0, %s29
      %s30 = sphi 0, %s27
      %s31 = sphi 0, %s30
      %s47 = sphi 0, %s31
      %s51 = sphi 0, %s51
      %s53 = sphi 0, %s51
      %s54 = sphi 0, %s53
      %s68 = sphi 0, %s54
      %s72 = sphi 0, %s72
      %s74 = sphi 0, %s72
      %s75 = sphi 0, %s74
      %s89 = sphi 0, %s75
      %s93 = sphi 0, %s93
      %s95 = sphi 0, %s93
      %s96 = sphi 0, %s95
      %s110 = sphi 0, %s96
      %s116 = sphi 0, %s118
      %s119 = sphi 0, %s116
      %s120 = sphi 0, %s119
      %s136 = sphi 0, %s120
    $region4: #{tpu_custom_call.1} parent=1 // loop_header_branch
      %20 = sbr.rel (%p18) target = $region8
    $region5: #{tpu_custom_call.1} parent=1 // loop_body
      %s22 = ssub.s32 %s17, 1
      %s23 = ssub.s32 %s17, 2
      %s24 = sadd.s32 %s17, 1
      %s25 = ssub.s32 %s17, %s24
      %p26 = scmp.eq.s32.totalorder %s25, 0
      %s28 = sadd.s32 %s27, 1
      %s29 = scalar_select %p26, %s27, %s28
      %p32 = pneg %p26
      %p33 = scmp.eq.s32.totalorder %s17, 1
      %p34 = por %p32, %p33
      %p35 = scmp.ne.s32.totalorder %s27, %s30
      %p36 = scmp.eq.s32.totalorder %s17, 0
      %p37 = por %p35, %p36
      %p38 = scmp.ne.s32.totalorder %s27, %s30
      %p39 = scmp.eq.s32.totalorder %s22, 1
      %p40 = por %p38, %p39
      %p41 = scmp.ne.s32.totalorder %s30, %s31
      %p42 = scmp.eq.s32.totalorder %s22, 0
      %p43 = por %p41, %p42
      %p44 = scmp.ne.s32.totalorder %s30, %s31
      %p45 = scmp.eq.s32.totalorder %s23, 1
      %p46 = por %p44, %p45
      %p48 = scmp.ne.s32.totalorder %s31, %s47
      %p49 = scmp.eq.s32.totalorder %s23, 0
      %p50 = por %p48, %p49
      %s52 = sadd.s32 %s51, 1
      %p55 = scmp.eq.s32.totalorder %s17, 1
      %p56 = scmp.ne.s32.totalorder %s51, %s53
      %p57 = scmp.eq.s32.totalorder %s17, 0
      %p58 = por %p56, %p57
      %p59 = scmp.ne.s32.totalorder %s51, %s53
      %p60 = scmp.eq.s32.totalorder %s22, 1
      %p61 = por %p59, %p60
      %p62 = scmp.ne.s32.totalorder %s53, %s54
      %p63 = scmp.eq.s32.totalorder %s22, 0
      %p64 = por %p62, %p63
      %p65 = scmp.ne.s32.totalorder %s53, %s54
      %p66 = scmp.eq.s32.totalorder %s23, 1
      %p67 = por %p65, %p66
      %p69 = scmp.ne.s32.totalorder %s54, %s68
      %p70 = scmp.eq.s32.totalorder %s23, 0
      %p71 = por %p69, %p70
      %s73 = sadd.s32 %s72, 1
      %p76 = scmp.eq.s32.totalorder %s17, 1
      %p77 = scmp.ne.s32.totalorder %s72, %s74
      %p78 = scmp.eq.s32.totalorder %s17, 0
      %p79 = por %p77, %p78
      %p80 = scmp.ne.s32.totalorder %s72, %s74
      %p81 = scmp.eq.s32.totalorder %s22, 1
      %p82 = por %p80, %p81
      %p83 = scmp.ne.s32.totalorder %s74, %s75
      %p84 = scmp.eq.s32.totalorder %s22, 0
      %p85 = por %p83, %p84
      %p86 = scmp.ne.s32.totalorder %s74, %s75
      %p87 = scmp.eq.s32.totalorder %s23, 1
      %p88 = por %p86, %p87
      %p90 = scmp.ne.s32.totalorder %s75, %s89
      %p91 = scmp.eq.s32.totalorder %s23, 0
      %p92 = por %p90, %p91
      %s94 = sadd.s32 %s93, 1
      %p97 = scmp.eq.s32.totalorder %s17, 1
      %p98 = scmp.ne.s32.totalorder %s93, %s95
      %p99 = scmp.eq.s32.totalorder %s17, 0
      %p100 = por %p98, %p99
      %p101 = scmp.ne.s32.totalorder %s93, %s95
      %p102 = scmp.eq.s32.totalorder %s22, 1
      %p103 = por %p101, %p102
      %p104 = scmp.ne.s32.totalorder %s95, %s96
      %p105 = scmp.eq.s32.totalorder %s22, 0
      %p106 = por %p104, %p105
      %p107 = scmp.ne.s32.totalorder %s95, %s96
      %p108 = scmp.eq.s32.totalorder %s23, 1
      %p109 = por %p107, %p108
      %p111 = scmp.ne.s32.totalorder %s96, %s110
      %p112 = scmp.eq.s32.totalorder %s23, 0
      %p113 = por %p111, %p112
      %s114 = ssub.s32 %s17, %s24
      %p115 = scmp.eq.s32.totalorder %s114, 0
      %s117 = sadd.s32 %s116, 1
      %s118 = scalar_select %p115, %s116, %s117
      %p121 = pneg %p115
      %p122 = scmp.eq.s32.totalorder %s17, 1
      %p123 = por %p121, %p122
      %p124 = scmp.ne.s32.totalorder %s116, %s119
      %p125 = scmp.eq.s32.totalorder %s17, 0
      %p126 = por %p124, %p125
      %p127 = scmp.ne.s32.totalorder %s116, %s119
      %p128 = scmp.eq.s32.totalorder %s22, 1
      %p129 = por %p127, %p128
      %p130 = scmp.ne.s32.totalorder %s119, %s120
      %p131 = scmp.eq.s32.totalorder %s22, 0
      %p132 = por %p130, %p131
      %p133 = scmp.ne.s32.totalorder %s119, %s120
      %p134 = scmp.eq.s32.totalorder %s23, 1
      %p135 = por %p133, %p134
      %p137 = scmp.ne.s32.totalorder %s120, %s136
      %p138 = scmp.eq.s32.totalorder %s23, 0
      %p139 = por %p137, %p138
      %p140 = scmp.le.s32.totalorder 1, %s17
      %p141 = scmp.lt.s32.totalorder %s17, 3
      %p142 = pnand %p140, %p141
      %p143 = pneg %p142
      // Predicated region
      $region9: #{tpu_custom_call.1} parent=5 // pred_check
        _
      $region10: #{tpu_custom_call.1} parent=5 // pred_check_branch
        %145 = sbr.rel (%p142) target = $region12
      $region11: #{tpu_custom_call.1} parent=5 // pred_region
        %s146 = ssub.s32 %s17, 1
        // Predicated region
        $region13: #{tpu_custom_call.1} parent=11 // pred_check
          %p147 = pneg %p64
        $region14: #{tpu_custom_call.1} parent=11 // pred_check_branch
          %149 = sbr.rel (%p147) target = $region16
        $region15: #{tpu_custom_call.1} parent=11 // pred_region
          %s151 = ssub.s32 3072, 3072
          %152 = vsyncadd [#allocation6], %s151
          %s153 = sshll.u32 [#allocation5], 4
          %s154 = int_to_ptr.vmem [resolvable:$true] %s153
          %159 = dma.hbm_to_vmem [thread:$0]  %s1, 3072, %s154, [#allocation6], 192, 192, 12
        $region16: #{tpu_custom_call.1} parent=11 // pred_fallthru
          _
        // Predicated region
        $region17: #{tpu_custom_call.1} parent=11 // pred_check
          %p160 = pneg %p85
        $region18: #{tpu_custom_call.1} parent=11 // pred_check_branch
          %162 = sbr.rel (%p160) target = $region20
        $region19: #{tpu_custom_call.1} parent=11 // pred_region
          _
        $region20: #{tpu_custom_call.1} parent=11 // pred_fallthru
          _
        // Predicated region
        $region21: #{tpu_custom_call.1} parent=11 // pred_check
          %p163 = pneg %p106
        $region22: #{tpu_custom_call.1} parent=11 // pred_check_branch
          %165 = sbr.rel (%p163) target = $region24
        $region23: #{tpu_custom_call.1} parent=11 // pred_region
          _
        $region24: #{tpu_custom_call.1} parent=11 // pred_fallthru
          _
      $region12: #{tpu_custom_call.1} parent=5 // pred_fallthru
        _
      %p166 = scmp.lt.s32.totalorder %s17, 2
      // Predicated region
      $region25: #{tpu_custom_call.1} parent=5 // pred_check
        %p167 = pneg %p166
      $region26: #{tpu_custom_call.1} parent=5 // pred_check_branch
        %169 = sbr.rel (%p167) target = $region28
      $region27: #{tpu_custom_call.1} parent=5 // pred_region
        // Predicated region
        $region29: #{tpu_custom_call.1} parent=27 // pred_check
          %p170 = pneg %p37
        $region30: #{tpu_custom_call.1} parent=27 // pred_check_branch
          %172 = sbr.rel (%p170) target = $region32
        $region31: #{tpu_custom_call.1} parent=27 // pred_region
          %s173 = sand.u32 %s27, 1
          %s174 = scalar_lea.sflag [#allocation3], %s173
          %s175 = sand.u32 %s27, 1
          %s176 = smul.addr %s175, 8
          %s177 = scalar_lea.vmem [#allocation2], %s176
          %s179 = ssub.s32 128, 128
          %180 = vsyncadd %s174, %s179
          %s181 = smul.addr %s17, 128
          %s182 = scalar_lea.hbm %s0, %s181
          %s184 = sshll.u32 %s177, 4
          %s185 = int_to_ptr.vmem [resolvable:$true] %s184
          %187 = dma.hbm_to_vmem [thread:$0]  %s182, 128, %s185, %s174
        $region32: #{tpu_custom_call.1} parent=27 // pred_fallthru
          _
      $region28: #{tpu_custom_call.1} parent=5 // pred_fallthru
        _
      %p188 = scmp.le.s32.totalorder 1, %s17
      %p189 = scmp.lt.s32.totalorder %s17, 3
      %p190 = pnand %p188, %p189
      %p191 = pneg %p190
      // Predicated region
      $region33: #{tpu_custom_call.1} parent=5 // pred_check
        _
      $region34: #{tpu_custom_call.1} parent=5 // pred_check_branch
        %193 = sbr.rel (%p190) target = $region36
      $region35: #{tpu_custom_call.1} parent=5 // pred_region
        %s194 = ssub.s32 %s17, 1
        %s195 = sand.u32 %s30, 1
        %s196 = scalar_lea.sflag [#allocation3], %s195
        %s197 = sand.u32 %s30, 1
        %s198 = smul.addr %s197, 8
        %s199 = scalar_lea.vmem [#allocation2], %s198
        // Predicated region
        $region37: #{tpu_custom_call.1} parent=35 // pred_check
          %p200 = pneg %p43
        $region38: #{tpu_custom_call.1} parent=35 // pred_check_branch
          %202 = sbr.rel (%p200) target = $region40
        $region39: #{tpu_custom_call.1} parent=35 // pred_region
          %203 = dma.done %s196, 128
        $region40: #{tpu_custom_call.1} parent=35 // pred_fallthru
          _
        // Predicated region
        $region41: #{tpu_custom_call.1} parent=35 // pred_check
          %p204 = pneg %p64
        $region42: #{tpu_custom_call.1} parent=35 // pred_check_branch
          %206 = sbr.rel (%p204) target = $region44
        $region43: #{tpu_custom_call.1} parent=35 // pred_region
          %207 = dma.done [#allocation6], 3072
        $region44: #{tpu_custom_call.1} parent=35 // pred_fallthru
          _
        %s208 = sand.u32 %s30, 1
        %s209 = scalar_lea.sflag [#allocation3], %s208
        %s210 = sand.u32 %s30, 1
        %s211 = smul.addr %s210, 8
        %s212 = scalar_lea.vmem [#allocation2], %s211
        %p213 = pneg %p43
        %p214 = pneg %p40
        %p215 = pneg %p64
        %p216 = pneg %p61
        %p217 = pneg %p85
        %p218 = pneg %p82
        %p219 = pneg %p106
        %p220 = pneg %p103
        %p221 = pneg %p132
        %p222 = pneg %p129
        %s223 = sand.u32 %s119, 1
        %s224 = scalar_lea.sflag [#allocation4], %s223
        %s225 = sand.u32 %s119, 1
        %s226 = smul.addr %s225, 8
        %s227 = scalar_lea.vmem [#allocation7], %s226
        %v229 = vld [vmem:[%s199] sm:$0xff]
        %v230 = vpack.c.bf16 %v229, %v229
        %v231 = vld [vmem:[#allocation5] sm:$0xff]
        %v232 = vld [vmem:[#allocation5 + $0x8] sm:$0xf]
        %v233 = vld [vmem:[#allocation5 + $0xc] sm:$0xff]
        %v234 = vld [vmem:[#allocation5 + $0x14] sm:$0xf]
        %v235 = vld [vmem:[#allocation5 + $0x18] sm:$0xff]
        %v236 = vld [vmem:[#allocation5 + $0x20] sm:$0xf]
        %v237 = vld [vmem:[#allocation5 + $0x24] sm:$0xff]
        %v238 = vld [vmem:[#allocation5 + $0x2c] sm:$0xf]
        %v239 = vld [vmem:[#allocation5 + $0x30] sm:$0xff]
        %v240 = vld [vmem:[#allocation5 + $0x38] sm:$0xf]
        %v241 = vld [vmem:[#allocation5 + $0x3c] sm:$0xff]
        %v242 = vld [vmem:[#allocation5 + $0x44] sm:$0xf]
        %v243 = vld [vmem:[#allocation5 + $0x48] sm:$0xff]
        %v244 = vld [vmem:[#allocation5 + $0x50] sm:$0xf]
        %v245 = vld [vmem:[#allocation5 + $0x54] sm:$0xff]
        %v246 = vld [vmem:[#allocation5 + $0x5c] sm:$0xf]
        %v247 = vld [vmem:[#allocation5 + $0x60] sm:$0xff]
        %v248 = vld [vmem:[#allocation5 + $0x68] sm:$0xf]
        %v249 = vld [vmem:[#allocation5 + $0x6c] sm:$0xff]
        %v250 = vld [vmem:[#allocation5 + $0x74] sm:$0xf]
        %v251 = vld [vmem:[#allocation5 + $0x78] sm:$0xff]
        %v252 = vld [vmem:[#allocation5 + $0x80] sm:$0xf]
        %v253 = vld [vmem:[#allocation5 + $0x84] sm:$0xff]
        %v254 = vld [vmem:[#allocation5 + $0x8c] sm:$0xf]
        %v255 = vld [vmem:[#allocation5 + $0x90] sm:$0xff]
        %v256 = vld [vmem:[#allocation5 + $0x98] sm:$0xf]
        %v257 = vld [vmem:[#allocation5 + $0x9c] sm:$0xff]
        %v258 = vld [vmem:[#allocation5 + $0xa4] sm:$0xf]
        %v259 = vld [vmem:[#allocation5 + $0xa8] sm:$0xff]
        %v260 = vld [vmem:[#allocation5 + $0xb0] sm:$0xf]
        %v261 = vld [vmem:[#allocation5 + $0xb4] sm:$0xff]
        %v262 = vld [vmem:[#allocation5 + $0xbc] sm:$0xf]
        %v295 = vunpack.c.l.b16 %v231
        %v296 = vunpack.c.h.b16 %v231
        %v297 = vunpack.c.l.b16 %v232
        %v298 = vunpack.c.l.b16 %v233
        %v299 = vunpack.c.h.b16 %v233
        %v300 = vunpack.c.l.b16 %v234
        %v301 = vunpack.c.l.b16 %v235
        %v302 = vunpack.c.h.b16 %v235
        %v303 = vunpack.c.l.b16 %v236
        %v304 = vunpack.c.l.b16 %v237
        %v305 = vunpack.c.h.b16 %v237
        %v306 = vunpack.c.l.b16 %v238
        %v307 = vunpack.c.l.b16 %v239
        %v308 = vunpack.c.h.b16 %v239
        %v309 = vunpack.c.l.b16 %v240
        %v310 = vunpack.c.l.b16 %v241
        %v311 = vunpack.c.h.b16 %v241
        %v312 = vunpack.c.l.b16 %v242
        %v313 = vunpack.c.l.b16 %v243
        %v314 = vunpack.c.h.b16 %v243
        %v315 = vunpack.c.l.b16 %v244
        %v316 = vunpack.c.l.b16 %v245
        %v317 = vunpack.c.h.b16 %v245
        %v318 = vunpack.c.l.b16 %v246
        %v319 = vunpack.c.l.b16 %v247
        %v320 = vunpack.c.h.b16 %v247
        %v321 = vunpack.c.l.b16 %v248
        %v322 = vunpack.c.l.b16 %v249
        %v323 = vunpack.c.h.b16 %v249
        %v324 = vunpack.c.l.b16 %v250
        %v325 = vunpack.c.l.b16 %v251
        %v326 = vunpack.c.h.b16 %v251
        %v327 = vunpack.c.l.b16 %v252
        %v328 = vunpack.c.l.b16 %v253
        %v329 = vunpack.c.h.b16 %v253
        %v330 = vunpack.c.l.b16 %v254
        %v331 = vunpack.c.l.b16 %v255
        %v332 = vunpack.c.h.b16 %v255
        %v333 = vunpack.c.l.b16 %v256
        %v334 = vunpack.c.l.b16 %v257
        %v335 = vunpack.c.h.b16 %v257
        %v336 = vunpack.c.l.b16 %v258
        %v337 = vunpack.c.l.b16 %v259
        %v338 = vunpack.c.h.b16 %v259
        %v339 = vunpack.c.l.b16 %v260
        %v340 = vunpack.c.l.b16 %v261
        %v341 = vunpack.c.h.b16 %v261
        %v342 = vunpack.c.l.b16 %v262
        %v343 = vpack.c.b16 %v298, %v295
        %v344 = vpack.c.b16 %v299, %v296
        %v345 = vpack.c.b16 %v300, %v297
        %v346 = vpack.c.b16 %v304, %v301
        %v347 = vpack.c.b16 %v305, %v302
        %v348 = vpack.c.b16 %v306, %v303
        %v349 = vpack.c.b16 %v310, %v307
        %v350 = vpack.c.b16 %v311, %v308
        %v351 = vpack.c.b16 %v312, %v309
        %v352 = vpack.c.b16 %v316, %v313
        %v353 = vpack.c.b16 %v317, %v314
        %v354 = vpack.c.b16 %v318, %v315
        %v355 = vpack.c.b16 %v322, %v319
        %v356 = vpack.c.b16 %v323, %v320
        %v357 = vpack.c.b16 %v324, %v321
        %v358 = vpack.c.b16 %v328, %v325
        %v359 = vpack.c.b16 %v329, %v326
        %v360 = vpack.c.b16 %v330, %v327
        %v361 = vpack.c.b16 %v334, %v331
        %v362 = vpack.c.b16 %v335, %v332
        %v363 = vpack.c.b16 %v336, %v333
        %v364 = vpack.c.b16 %v340, %v337
        %v365 = vpack.c.b16 %v341, %v338
        %v366 = vpack.c.b16 %v342, %v339
        %391 = vmatprep.subr.bf16.mxu0 %v344
        %392 = vmatpush1.bf16.msra.mxu0 %v343
        %393 = vmatprep.subr.bf16.mxu0 %v347
        %394 = vmatpush1.bf16.msra.mxu0 %v346
        %395 = vmatprep.subr.bf16.mxu0 %v350
        %396 = vmatpush1.bf16.msra.mxu0 %v349
        %397 = vmatprep.subr.bf16.mxu0 %v353
        %398 = vmatpush1.bf16.msra.mxu0 %v352
        %399 = vmatprep.subr.bf16.mxu0 %v356
        %400 = vmatpush1.bf16.msra.mxu0 %v355
        %401 = vmatprep.subr.bf16.mxu0 %v359
        %402 = vmatpush1.bf16.msra.mxu0 %v358
        %403 = vmatprep.subr.bf16.mxu0 %v362
        %404 = vmatpush1.bf16.msra.mxu0 %v361
        %405 = vmatprep.subr.bf16.mxu0 %v365
        %406 = vmatpush1.bf16.msra.mxu0 %v364
        %407 = vmatprep.subr.bf16.mxu0 0
        %408 = vmatpush1.bf16.msra.mxu0 0
        %409 = vmatprep.subr.bf16.mxu0 0
        %410 = vmatpush1.bf16.msra.mxu0 0
        %411 = vmatprep.subr.bf16.mxu0 0
        %412 = vmatpush1.bf16.msra.mxu0 0
        %413 = vmatprep.subr.bf16.mxu0 0
        %414 = vmatpush1.bf16.msra.mxu0 0
        %415 = vmatprep.subr.bf16.mxu0 0
        %416 = vmatpush1.bf16.msra.mxu0 0
        %417 = vmatprep.subr.bf16.mxu0 0
        %418 = vmatpush1.bf16.msra.mxu0 0
        %419 = vmatprep.subr.bf16.mxu0 0
        %420 = vmatpush1.bf16.msra.mxu0 0
        %421 = vmatprep.subr.bf16.mxu0 0
        %422 = vmatpush1.bf16.msra.mxu0 0
        %423 = vmatprep.mubr.bf16.mxu0 0
        %424 = vmatmul.mubr.bf16.gmra.mrb[0].mxu0 %v230
        %v425 = vpop.f32.mrb[0].mxu0
        %v426 = vadd.f32 0.0, %v425
        %v427 = vpop.f32.mrb[0].mxu0
        %v428 = vadd.f32 0.0, %v427
        %v429 = vpop.f32.mrb[0].mxu0
        %v430 = vpop.f32.mrb[0].mxu0
        %431 = vdwg.mxu0
        %432 = vmatprep.subr.bf16.mxu0 0
        %433 = vmatpush1.bf16.msra.mxu0 %v345
        %434 = vmatprep.subr.bf16.mxu0 0
        %435 = vmatpush1.bf16.msra.mxu0 %v348
        %436 = vmatprep.subr.bf16.mxu0 0
        %437 = vmatpush1.bf16.msra.mxu0 %v351
        %438 = vmatprep.subr.bf16.mxu0 0
        %439 = vmatpush1.bf16.msra.mxu0 %v354
        %440 = vmatprep.subr.bf16.mxu0 0
        %441 = vmatpush1.bf16.msra.mxu0 %v357
        %442 = vmatprep.subr.bf16.mxu0 0
        %443 = vmatpush1.bf16.msra.mxu0 %v360
        %444 = vmatprep.subr.bf16.mxu0 0
        %445 = vmatpush1.bf16.msra.mxu0 %v363
        %446 = vmatprep.subr.bf16.mxu0 0
        %447 = vmatpush1.bf16.msra.mxu0 %v366
        %448 = vmatprep.subr.bf16.mxu0 0
        %449 = vmatpush1.bf16.msra.mxu0 0
        %450 = vmatprep.subr.bf16.mxu0 0
        %451 = vmatpush1.bf16.msra.mxu0 0
        %452 = vmatprep.subr.bf16.mxu0 0
        %453 = vmatpush1.bf16.msra.mxu0 0
        %454 = vmatprep.subr.bf16.mxu0 0
        %455 = vmatpush1.bf16.msra.mxu0 0
        %456 = vmatprep.subr.bf16.mxu0 0
        %457 = vmatpush1.bf16.msra.mxu0 0
        %458 = vmatprep.subr.bf16.mxu0 0
        %459 = vmatpush1.bf16.msra.mxu0 0
        %460 = vmatprep.subr.bf16.mxu0 0
        %461 = vmatpush1.bf16.msra.mxu0 0
        %462 = vmatprep.subr.bf16.mxu0 0
        %463 = vmatpush1.bf16.msra.mxu0 0
        %464 = vmatprep.mubr.bf16.mxu0 0
        %465 = vmatmul.mubr.bf16.gmra.mrb[0].mxu0 %v230
        %v466 = vpop.f32.mrb[0].mxu0
        %v467 = vadd.f32 0.0, %v466
        %v468 = vpop.f32.mrb[0].mxu0
        %v469 = vpop.f32.mrb[0].mxu0
        %v470 = vpop.f32.mrb[0].mxu0
        %471 = vdwg.mxu0
        %v472 = vpack.c.bf16 %v426, %v426
        %v473 = vpack.c.bf16 %v428, %v428
        %v474 = vpack.c.bf16 %v467, %v467
        %475 = vmatprep.subr.bf16.mxu0 0
        %476 = vmatpush1.bf16.xpose.msra.mxu0 %v473
        %477 = vmatprep.subr.bf16.mxu0 0
        %478 = vmatpush1.bf16.xpose.msra.mxu0 0
        %479 = vmatprep.subr.bf16.mxu0 0
        %480 = vmatpush1.bf16.xpose.msra.mxu0 0
        %481 = vmatprep.subr.bf16.mxu0 0
        %482 = vmatpush1.bf16.xpose.msra.mxu0 0
        %483 = vmatprep.subr.bf16.mxu0 0
        %484 = vmatpush1.bf16.xpose.msra.mxu0 0
        %485 = vmatprep.subr.bf16.mxu0 0
        %486 = vmatpush1.bf16.xpose.msra.mxu0 0
        %487 = vmatprep.subr.bf16.mxu0 0
        %488 = vmatpush1.bf16.xpose.msra.mxu0 0
        %489 = vmatprep.subr.bf16.mxu0 0
        %490 = vmatpush1.bf16.xpose.msra.mxu0 0
        %491 = vmatprep.subr.bf16.mxu0 0
        %492 = vmatpush1.bf16.xpose.msra.mxu0 0
        %493 = vmatprep.subr.bf16.mxu0 0
        %494 = vmatpush1.bf16.xpose.msra.mxu0 0
        %495 = vmatprep.subr.bf16.mxu0 0
        %496 = vmatpush1.bf16.xpose.msra.mxu0 0
        %497 = vmatprep.subr.bf16.mxu0 0
        %498 = vmatpush1.bf16.xpose.msra.mxu0 0
        %499 = vmatprep.subr.bf16.mxu0 0
        %500 = vmatpush1.bf16.xpose.msra.mxu0 0
        %501 = vmatprep.subr.bf16.mxu0 0
        %502 = vmatpush1.bf16.xpose.msra.mxu0 0
        %503 = vmatprep.subr.bf16.mxu0 0
        %504 = vmatpush1.bf16.xpose.msra.mxu0 0
        %505 = vmatprep.subr.bf16.mxu0 0
        %506 = vmatpush1.bf16.xpose.msra.mxu0 0
        %507 = vmatprep.mubr.bf16.mxu0 0
        %508 = vmatmul.mubr.bf16.gmra.mrb[0].mxu0 %v472
        %v509 = vpop.f32.mrb[0].mxu0
        %v510 = vadd.f32 0.0, %v509
        %v511 = vpop.f32.mrb[0].mxu0
        %v512 = vpop.f32.mrb[0].mxu0
        %v513 = vpop.f32.mrb[0].mxu0
        %514 = vdwg.mxu0
        %vm515 = vcmask 64512
        %v516 = vsel %vm515, %v510, -inf
        %517 = vmax.xlane.f32.xlu0 %v516
        %v518 = vpop.xlane.xlu0 %517
        %v519 = vsub.f32 %v510, %v518
        %v520 = vmul.f32 %v519, 1.442695
        %v521 = vpow.pop %v520
        %v522 = vsel %vm515, %v521, 0.0
        %523 = vadd.xlane.f32.xlu0 %v522
        %v524 = vpop.xlane.xlu0 %523
        %v525 = vpack.c.bf16 %v521, %v521
        %v527 = vsel %vm515, %v525, 0
        %vm529 = vcmask 1043456
        %v531 = vsel %vm529, %v474, 0
        %533 = vmatprep.subr.bf16.mxu0 0
        %534 = vmatpush1.bf16.msra.mxu0 %v531
        %535 = vmatprep.subr.bf16.mxu0 0
        %536 = vmatpush1.bf16.msra.mxu0 0
        %537 = vmatprep.subr.bf16.mxu0 0
        %538 = vmatpush1.bf16.msra.mxu0 0
        %539 = vmatprep.subr.bf16.mxu0 0
        %540 = vmatpush1.bf16.msra.mxu0 0
        %541 = vmatprep.subr.bf16.mxu0 0
        %542 = vmatpush1.bf16.msra.mxu0 0
        %543 = vmatprep.subr.bf16.mxu0 0
        %544 = vmatpush1.bf16.msra.mxu0 0
        %545 = vmatprep.subr.bf16.mxu0 0
        %546 = vmatpush1.bf16.msra.mxu0 0
        %547 = vmatprep.subr.bf16.mxu0 0
        %548 = vmatpush1.bf16.msra.mxu0 0
        %549 = vmatprep.subr.bf16.mxu0 0
        %550 = vmatpush1.bf16.msra.mxu0 0
        %551 = vmatprep.subr.bf16.mxu0 0
        %552 = vmatpush1.bf16.msra.mxu0 0
        %553 = vmatprep.subr.bf16.mxu0 0
        %554 = vmatpush1.bf16.msra.mxu0 0
        %555 = vmatprep.subr.bf16.mxu0 0
        %556 = vmatpush1.bf16.msra.mxu0 0
        %557 = vmatprep.subr.bf16.mxu0 0
        %558 = vmatpush1.bf16.msra.mxu0 0
        %559 = vmatprep.subr.bf16.mxu0 0
        %560 = vmatpush1.bf16.msra.mxu0 0
        %561 = vmatprep.subr.bf16.mxu0 0
        %562 = vmatpush1.bf16.msra.mxu0 0
        %563 = vmatprep.subr.bf16.mxu0 0
        %564 = vmatpush1.bf16.msra.mxu0 0
        %565 = vmatprep.mubr.bf16.mxu0 0
        %566 = vmatmul.mubr.bf16.gmra.mrb[0].mxu0 %v527
        %v567 = vpop.f32.mrb[0].mxu0
        %v568 = vadd.f32 0.0, %v567
        %v569 = vpop.f32.mrb[0].mxu0
        %v570 = vpop.f32.mrb[0].mxu0
        %v571 = vpop.f32.mrb[0].mxu0
        %572 = vdwg.mxu0
        %v573 = vrcp.pop %v524
        %v574 = vmul.f32 %v568, %v573
        %v575 = vadd.f32 %v574, %v229
        %576 = vadd.xlane.f32.xlu0 %v575
        %v577 = vpop.xlane.xlu0 %576
        %v578 = vmul.f32 %v577, 0.03125
        %v579 = vmul.f32 %v575, %v575
        %580 = vadd.xlane.f32.xlu0 %v579
        %v581 = vpop.xlane.xlu0 %580
        %v582 = vmul.f32 %v581, 0.03125
        %v583 = vmul.f32 %v578, %v578
        %v584 = vsub.f32 %v582, %v583
        %v585 = vadd.f32 %v584, 1e-05
        %v586 = vrsqrt.pop %v585
        %v587 = vld [vmem:[%s2] sm:$0x1]
        %v588 = vld [vmem:[%s3] sm:$0x1]
        %v589 = vsub.f32 %v575, %v578
        %v590 = vmul.f32 %v589, %v586
        %v592 = vlaneseq
        %v593 = vshrl.u32 %v592, 7
        %v594 = vsub.s32 0, %v593
        %v595 = vrot.slane %v587, %v594
        %v597 = vmul.f32 %v590, %v595
        %v599 = vlaneseq
        %v600 = vshrl.u32 %v599, 7
        %v601 = vsub.s32 0, %v600
        %v602 = vrot.slane %v588, %v601
        %v604 = vadd.f32 %v597, %v602
        %605 = vst [vmem:[%s227] sm:$0xff] %v604
        %s606 = sand.u32 %s119, 1
        %s607 = scalar_lea.sflag [#allocation4], %s606
        %s608 = sand.u32 %s119, 1
        %s609 = smul.addr %s608, 8
        %s610 = scalar_lea.vmem [#allocation7], %s609
        // Predicated region
        $region45: #{tpu_custom_call.1} parent=35 // pred_check
          %p611 = pneg %p129
        $region46: #{tpu_custom_call.1} parent=35 // pred_check_branch
          %613 = sbr.rel (%p611) target = $region48
        $region47: #{tpu_custom_call.1} parent=35 // pred_region
          %s615 = ssub.s32 128, 128
          %616 = vsyncadd %s607, %s615
          %s617 = smul.addr %s22, 128
          %s618 = scalar_lea.hbm %s4, %s617
          %s620 = sshll.u32 %s610, 4
          %s621 = int_to_ptr.vmem [resolvable:$true] %s620
          %623 = dma.vmem_to_hbm [thread:$0]  %s621, 128, %s618, %s607
        $region48: #{tpu_custom_call.1} parent=35 // pred_fallthru
          _
      $region36: #{tpu_custom_call.1} parent=5 // pred_fallthru
        _
      %p624 = scmp.le.s32.totalorder 2, %s17
      // Predicated region
      $region49: #{tpu_custom_call.1} parent=5 // pred_check
        %p625 = pneg %p624
      $region50: #{tpu_custom_call.1} parent=5 // pred_check_branch
        %627 = sbr.rel (%p625) target = $region52
      $region51: #{tpu_custom_call.1} parent=5 // pred_region
        %s628 = ssub.s32 %s17, 2
        // Predicated region
        $region53: #{tpu_custom_call.1} parent=51 // pred_check
          %p629 = pneg %p135
        $region54: #{tpu_custom_call.1} parent=51 // pred_check_branch
          %631 = sbr.rel (%p629) target = $region56
        $region55: #{tpu_custom_call.1} parent=51 // pred_region
          %s632 = sand.u32 %s120, 1
          %s633 = scalar_lea.sflag [#allocation4], %s632
          %s634 = sand.u32 %s120, 1
          %s635 = smul.addr %s634, 8
          %s636 = scalar_lea.vmem [#allocation7], %s635
          %637 = dma.done %s633, 128
        $region56: #{tpu_custom_call.1} parent=51 // pred_fallthru
          _
      $region52: #{tpu_custom_call.1} parent=5 // pred_fallthru
        _
    $region6: #{tpu_custom_call.1} parent=1 // loop_footer
      %s21 = sadd.s32 1, %s17
    $region7: #{tpu_custom_call.1} parent=1 // loop_footer_branch
      %16 = sbr.rel target = $region3
    $region8: #{tpu_custom_call.1} parent=1 // loop_exit
      _
    %638 = vsyncpa [#allocation3], 1
    %s639 = scalar_lea.sflag [#allocation3], 1
    %640 = vsyncpa %s639, 1
    %641 = vsyncpa [#allocation6], 1
    %642 = vsyncpa [#allocation4], 1
    %s643 = scalar_lea.sflag [#allocation4], 1
    %644 = vsyncpa %s643, 1

</llo_original>
